<compile_context>
chip_gen: v7x
topology: tpu7x:2x2x1
jax: 0.10.0
libtpu: 0.0.40
codegen_flags: <defaults>
</compile_context>

<pallas_src>
import jax
import jax.numpy as jnp
from jax.experimental import pallas as pl
from jax.experimental.pallas import tpu as pltpu

PACK = 128  # original rows packed per lane-dense row


def _logreg_kernel(x_ref, w_ref, b_ref, o_ref):
    # x_ref: (TILE_R, 128*D) f32 VMEM   -- 128 original rows packed per row, lane-dense
    # w_ref: (128*D, 128)    f32 VMEM   -- block-diagonal weight expansion (resident)
    # b_ref: (1,)            f32 SMEM   -- scalar bias
    # o_ref: (TILE_R, 128)   f32 VMEM   -- logit/sigmoid of original row r*128 + j at [r, j]
    logits = jnp.dot(x_ref[...], w_ref[...], preferred_element_type=jnp.float32)  # MXU
    o_ref[...] = jax.nn.sigmoid(logits + b_ref[0]).astype(o_ref.dtype)            # EUP


def logistic_regression_forward(x, weight, bias, *, block_bytes=4 * 1024 * 1024):
    """Equivalent of logisticRegressionNet.forward.

    x:      (B, inputSize) float32
    weight: (1, inputSize) float32  (PyTorch nn.Linear convention)
    bias:   (1,)           float32
    returns: sigmoid(x @ weight.T + bias).squeeze()
    """
    B, D = x.shape
    O, D_w = weight.shape
    assert D_w == D and O == 1, (weight.shape, x.shape)

    # Pack 128 original rows per lane-dense row.  Pad only for ragged batches (<=127 rows).
    # TODO(synk): ragged (B % 128 != 0) batches still pay one pad copy of x; the <=127 tail
    # rows could instead be routed through a tiny plain-JAX matvec if this ever matters.
    B_pad = pl.cdiv(B, PACK) * PACK
    if B_pad != B:
        x = jnp.pad(x, ((0, B_pad - B), (0, 0)))
    rows = B_pad // PACK
    Kdim = PACK * D

    x2 = x.reshape(rows, Kdim)                       # free, contiguous reshape
    # Block-diagonal weight expansion: W2[j*D + d, j] = w[d], zeros elsewhere.
    w2 = jnp.kron(jnp.eye(PACK, dtype=x.dtype), weight.reshape(D, 1).astype(x.dtype))

    # Block size: ~block_bytes of x per grid step (multiple of 8 sublanes).
    tile_rows = max(8, (block_bytes // (Kdim * 4)) // 8 * 8)
    if rows > tile_rows:
        TILE_R = tile_rows
    elif rows >= 16:
        # Mid-sized input: split into (at least) 2 steps so both v7x TensorCores get work.
        TILE_R = max(8, (((rows + 1) // 2) + 7) // 8 * 8)
    else:
        TILE_R = rows                                # tiny input: single full-array block
    grid = (pl.cdiv(rows, TILE_R),)                  # partial last block handled by Pallas

    out = pl.pallas_call(
        _logreg_kernel,
        out_shape=jax.ShapeDtypeStruct((rows, PACK), x.dtype),
        grid=grid,
        in_specs=[
            pl.BlockSpec((TILE_R, Kdim), lambda i: (i, 0)),          # x tile per grid step
            pl.BlockSpec((Kdim, PACK), lambda i: (0, 0)),            # weight (VMEM-resident)
            pl.BlockSpec(memory_space=pltpu.MemorySpace.SMEM),       # bias scalar in SMEM
        ],
        out_specs=pl.BlockSpec((TILE_R, PACK), lambda i: (i, 0)),    # dense sublane+lane out
        compiler_params=pltpu.CompilerParams(
            dimension_semantics=("parallel",),        # shard batch grid over v7x's 2 TCs
            vmem_limit_bytes=32 * 1024 * 1024,        # safe on v5e/v6e/v7x; fits 2x4MiB x-bufs
        ),
        cost_estimate=pl.CostEstimate(
            flops=2 * rows * Kdim * PACK,
            transcendentals=B_pad,
            bytes_accessed=B_pad * D * 4 + Kdim * PACK * 4 + B_pad * 4,
        ),
    )(x2, w2, bias)

    out = out.reshape(B_pad)[:B]     # row r*128+j of the original batch is at flat index r*128+j
    # Mimic torch .squeeze(): (B,) stays (B,); B == 1 collapses to a scalar.
    return jnp.squeeze(out)


if __name__ == "__main__":
    key = jax.random.PRNGKey(0)
    kx1, kx2, kw, kb = jax.random.split(key, 4)

    input_size, output_size = 32, 1
    bound = 1.0 / (input_size ** 0.5)
    weight = jax.random.uniform(kw, (output_size, input_size), jnp.float32, -bound, bound)
    bias = jax.random.uniform(kb, (output_size,), jnp.float32, -bound, bound)

    def ref(x):
        return jnp.squeeze(jax.nn.sigmoid(x @ weight.T + bias))

    # Case 1: small aligned batch (single full-array block, one grid step).
    x1 = jax.random.normal(kx1, (256, input_size), jnp.float32)
    y1 = logistic_regression_forward(x1, weight, bias)
    jax.block_until_ready(y1)
    assert y1.shape == (256,), y1.shape
    assert jnp.allclose(y1, ref(x1), atol=1e-5, rtol=1e-5), float(jnp.max(jnp.abs(y1 - ref(x1))))

    # Case 2: ragged batch (exercises the 128-row pad, a 2-step grid and a partial last block).
    x2 = jax.random.normal(kx2, (2000, input_size), jnp.float32)
    y2 = logistic_regression_forward(x2, weight, bias)
    jax.block_until_ready(y2)
    assert y2.shape == (2000,), y2.shape
    assert jnp.allclose(y2, ref(x2), atol=1e-5, rtol=1e-5), float(jnp.max(jnp.abs(y2 - ref(x2))))

    print("KERNEL_OK")
</pallas_src>

<mosaic_0001>
module attributes {stable_mosaic.version = 11 : i64} {
  func.func @_logreg_kernel(%arg0: i32, %arg1: memref<2x4096xf32, #tpu.memory_space<vmem>>, %arg2: memref<4096x128xf32, #tpu.memory_space<vmem>>, %arg3: memref<1xf32, #tpu.memory_space<smem>>, %arg4: memref<2x128xf32, #tpu.memory_space<vmem>>) attributes {dimension_semantics = [#tpu.dimension_semantics<parallel>], iteration_bounds = array<i64: 1>, scalar_prefetch = 0 : i64, scratch_operands = 0 : i64, tpu.core_type = #tpu.core_type<tc>, window_params = [{transform_indices = @transform_0, window_bounds = array<i64: 2, 4096>}, {pipeline_mode = #tpu.pipeline_mode<synchronous>, transform_indices = @transform_1, window_bounds = array<i64: 4096, 128>}, {transform_indices = @transform_2, window_bounds = array<i64: 1>}, {transform_indices = @transform_3, window_bounds = array<i64: 2, 128>}]} {
    %c0 = arith.constant 0 : index
    %c0_0 = arith.constant 0 : index
    %0 = vector.load %arg1[%c0, %c0_0] : memref<2x4096xf32, #tpu.memory_space<vmem>>, vector<2x4096xf32>
    %c0_1 = arith.constant 0 : index
    %c0_2 = arith.constant 0 : index
    %1 = vector.load %arg2[%c0_1, %c0_2] : memref<4096x128xf32, #tpu.memory_space<vmem>>, vector<4096x128xf32>
    %cst = arith.constant dense<0.000000e+00> : vector<2x128xf32>
    %2 = tpu.matmul %0, %1, %cst {dimension_numbers = #tpu.dot_dimension_numbers<[1], [0], [0], [1], [0, 0, 1, 1], [], []>} : vector<2x4096xf32>, vector<4096x128xf32>, vector<2x128xf32> -> vector<2x128xf32>
    %c0_3 = arith.constant 0 : index
    %3 = memref.load %arg3[%c0_3] : memref<1xf32, #tpu.memory_space<smem>>
    %4 = vector.broadcast %3 : f32 to vector<2x128xf32>
    %5 = arith.addf %2, %4 : vector<2x128xf32>
    %6 = arith.negf %5 : vector<2x128xf32>
    %7 = math.exp %6 : vector<2x128xf32>
    %cst_4 = arith.constant 1.000000e+00 : f32
    %8 = vector.broadcast %cst_4 : f32 to vector<2x128xf32>
    %9 = arith.addf %8, %7 : vector<2x128xf32>
    %10 = arith.divf %8, %9 : vector<2x128xf32>
    %c0_5 = arith.constant 0 : index
    %c0_6 = arith.constant 0 : index
    %11 = vector.load %arg4[%c0_5, %c0_6] : memref<2x128xf32, #tpu.memory_space<vmem>>, vector<2x128xf32>
    tpu.vector_store %arg4[%c0_5, %c0_6], %10 {strides = array<i32>} : memref<2x128xf32, #tpu.memory_space<vmem>>, vector<2x128xf32>,
    return
  }
  func.func @transform_0(%arg0: i32) -> (i32, i32) {
    %c0_i32 = arith.constant 0 : i32
    %c0_i32_0 = arith.constant 0 : i32
    return %arg0, %c0_i32 : i32, i32
  }
  func.func @transform_1(%arg0: i32) -> (i32, i32) {
    %c0_i32 = arith.constant 0 : i32
    %c0_i32_0 = arith.constant 0 : i32
    %c0_i32_1 = arith.constant 0 : i32
    return %c0_i32, %c0_i32_0 : i32, i32
  }
  func.func @transform_2(%arg0: i32) -> i32 {
    %c0_i32 = arith.constant 0 : i32
    %c0_i32_0 = arith.constant 0 : i32
    return %c0_i32 : i32
  }
  func.func @transform_3(%arg0: i32) -> (i32, i32) {
    %c0_i32 = arith.constant 0 : i32
    %c0_i32_0 = arith.constant 0 : i32
    return %arg0, %c0_i32 : i32, i32
  }
}

</mosaic_0001>

<llo_original>
// kernel: tpu_custom_call.1
$region0: #{tpu_custom_call.1}
  #allocation0 [shape = 'u32[]', space=smem, size = 0x4, offset = 0x4, fixed_abs, tag = 'smem constant byte address 0x4 - core index']
  #allocation1 [shape = 'u32[144,128]{1,0:T(1,128)}', space=vmem, size = 0x12000, scoped, tag = 'internal scratch']
  #allocation2 [shape = 'f32[1]{0:T(128)S(6)}', space=smem, size = 0x200, scoped, tag = 'scoped memory for tpu_custom_call.1']
  %s0 = inlined_call_operand.hbm [shape: f32[2,4096], index: 0, kind: input, shape index: {}]
  %s1 = inlined_call_operand.hbm [shape: f32[4096,128], index: 1, kind: input, shape index: {}]
  %s2 = inlined_call_operand.<no memory space> [shape: f32[1], index: 2, kind: input, shape index: {}]
  %s3 = inlined_call_operand.hbm [shape: f32[2,128], index: 3, kind: output, shape index: {}]
  %s4 = sld [smem:[#allocation0]]
  $region30: #{tpu_custom_call.1} parent=0
    _
  %s6 = ssub.s32 1, %s4
  %s7 = scalar_select 0, %s6, %s4
  %8 = sst [smem:[#allocation2]] %s2
  $region1: #{tpu_custom_call.1} parent=0
    #allocation3 [shape = 'u8[32768]{0}', space=vmem, size = 0x8000, scoped, tag = 'input window, operand 0, single buffered']
    #allocation4 [shape = 's32[1]{0}', space=sflag, size = 0x4, scoped, tag = 'scoped memory for tpu_custom_call.1']
    #allocation5 [shape = 's32[1]{0}', space=sflag, size = 0x4, scoped, tag = 'scoped memory for tpu_custom_call.1']
    #allocation6 [shape = 'u8[2097152]{0}', space=vmem, size = 0x200000, scoped, tag = 'input window, operand 1, single buffered']
    #allocation7 [shape = 's32[1]{0}', space=sflag, size = 0x4, scoped, tag = 'scoped memory for tpu_custom_call.1']
    #allocation8 [shape = 'u8[1024]{0}', space=vmem, size = 0x400, scoped, tag = 'output window, operand 0, single buffered']
    %9 = vsyncpa [#allocation4], 0
    %10 = vsyncpa [#allocation7], 0
    %11 = vsyncpa [#allocation5], 0
    // Predicated region
    $region2: #{tpu_custom_call.1} parent=1 // pred_check
      _
    $region3: #{tpu_custom_call.1} parent=1 // pred_check_branch
      %13 = sbr.rel (0) target = $region5
    $region4: #{tpu_custom_call.1} parent=1 // pred_region
      %s15 = ssub.s32 1024, 1024
      %16 = vsyncadd [#allocation4], %s15
      %s18 = sshll.u32 [#allocation3], 4
      %s19 = int_to_ptr.vmem [resolvable:$true] %s18
      %21 = dma.hbm_to_vmem [thread:$0]  %s0, 1024, %s19, [#allocation4]
    $region5: #{tpu_custom_call.1} parent=1 // pred_fallthru
      _
    // Predicated region
    $region6: #{tpu_custom_call.1} parent=1 // pred_check
      _
    $region7: #{tpu_custom_call.1} parent=1 // pred_check_branch
      %23 = sbr.rel (0) target = $region9
    $region8: #{tpu_custom_call.1} parent=1 // pred_region
      %s25 = ssub.s32 65536, 65536
      %26 = vsyncadd [#allocation7], %s25
      %s27 = sshll.u32 [#allocation6], 4
      %s28 = int_to_ptr.vmem [resolvable:$true] %s27
      %33 = dma.hbm_to_vmem [thread:$0]  %s1, 65536, %s28, [#allocation7], 128, 128, 8
    $region9: #{tpu_custom_call.1} parent=1 // pred_fallthru
      _
    // Predicated region
    $region10: #{tpu_custom_call.1} parent=1 // pred_check
      _
    $region11: #{tpu_custom_call.1} parent=1 // pred_check_branch
      %35 = sbr.rel (0) target = $region13
    $region12: #{tpu_custom_call.1} parent=1 // pred_region
      _
    $region13: #{tpu_custom_call.1} parent=1 // pred_fallthru
      _
    // Predicated region
    $region14: #{tpu_custom_call.1} parent=1 // pred_check
      _
    $region15: #{tpu_custom_call.1} parent=1 // pred_check_branch
      %37 = sbr.rel (0) target = $region17
    $region16: #{tpu_custom_call.1} parent=1 // pred_region
      %38 = dma.done [#allocation4], 1024
    $region17: #{tpu_custom_call.1} parent=1 // pred_fallthru
      _
    // Predicated region
    $region18: #{tpu_custom_call.1} parent=1 // pred_check
      _
    $region19: #{tpu_custom_call.1} parent=1 // pred_check_branch
      %40 = sbr.rel (0) target = $region21
    $region20: #{tpu_custom_call.1} parent=1 // pred_region
      %41 = dma.done [#allocation7], 65536
    $region21: #{tpu_custom_call.1} parent=1 // pred_fallthru
      _
    %v42 = vld [vmem:[#allocation3] sm:$0xff]
    %v43 = vld [vmem:[#allocation3 + $0x8] sm:$0xff]
    %v44 = vld [vmem:[#allocation3 + $0x10] sm:$0xff]
    %v45 = vld [vmem:[#allocation3 + $0x18] sm:$0xff]
    %v46 = vld [vmem:[#allocation3 + $0x20] sm:$0xff]
    %v47 = vld [vmem:[#allocation3 + $0x28] sm:$0xff]
    %v48 = vld [vmem:[#allocation3 + $0x30] sm:$0xff]
    %v49 = vld [vmem:[#allocation3 + $0x38] sm:$0xff]
    %v50 = vld [vmem:[#allocation6] sm:$0xff]
    %v51 = vld [vmem:[#allocation6 + $0x8] sm:$0xff]
    %v52 = vld [vmem:[#allocation6 + $0x10] sm:$0xff]
    %v53 = vld [vmem:[#allocation6 + $0x18] sm:$0xff]
    %v54 = vld [vmem:[#allocation6 + $0x20] sm:$0xff]
    %v55 = vld [vmem:[#allocation6 + $0x28] sm:$0xff]
    %v56 = vld [vmem:[#allocation6 + $0x30] sm:$0xff]
    %v57 = vld [vmem:[#allocation6 + $0x38] sm:$0xff]
    %v58 = vld [vmem:[#allocation6 + $0x40] sm:$0xff]
    %v59 = vld [vmem:[#allocation6 + $0x48] sm:$0xff]
    %v60 = vld [vmem:[#allocation6 + $0x50] sm:$0xff]
    %v61 = vld [vmem:[#allocation6 + $0x58] sm:$0xff]
    %v62 = vld [vmem:[#allocation6 + $0x60] sm:$0xff]
    %v63 = vld [vmem:[#allocation6 + $0x68] sm:$0xff]
    %v64 = vld [vmem:[#allocation6 + $0x70] sm:$0xff]
    %v65 = vld [vmem:[#allocation6 + $0x78] sm:$0xff]
    %v66 = vld [vmem:[#allocation6 + $0x80] sm:$0xff]
    %v67 = vld [vmem:[#allocation6 + $0x88] sm:$0xff]
    %v68 = vld [vmem:[#allocation6 + $0x90] sm:$0xff]
    %v69 = vld [vmem:[#allocation6 + $0x98] sm:$0xff]
    %v70 = vld [vmem:[#allocation6 + $0xa0] sm:$0xff]
    %v71 = vld [vmem:[#allocation6 + $0xa8] sm:$0xff]
    %v72 = vld [vmem:[#allocation6 + $0xb0] sm:$0xff]
    %v73 = vld [vmem:[#allocation6 + $0xb8] sm:$0xff]
    %v74 = vld [vmem:[#allocation6 + $0xc0] sm:$0xff]
    %v75 = vld [vmem:[#allocation6 + $0xc8] sm:$0xff]
    %v76 = vld [vmem:[#allocation6 + $0xd0] sm:$0xff]
    %v77 = vld [vmem:[#allocation6 + $0xd8] sm:$0xff]
    %v78 = vld [vmem:[#allocation6 + $0xe0] sm:$0xff]
    %v79 = vld [vmem:[#allocation6 + $0xe8] sm:$0xff]
    %v80 = vld [vmem:[#allocation6 + $0xf0] sm:$0xff]
    %v81 = vld [vmem:[#allocation6 + $0xf8] sm:$0xff]
    %v82 = vld [vmem:[#allocation6 + $0x100] sm:$0xff]
    %v83 = vld [vmem:[#allocation6 + $0x108] sm:$0xff]
    %v84 = vld [vmem:[#allocation6 + $0x110] sm:$0xff]
    %v85 = vld [vmem:[#allocation6 + $0x118] sm:$0xff]
    %v86 = vld [vmem:[#allocation6 + $0x120] sm:$0xff]
    %v87 = vld [vmem:[#allocation6 + $0x128] sm:$0xff]
    %v88 = vld [vmem:[#allocation6 + $0x130] sm:$0xff]
    %v89 = vld [vmem:[#allocation6 + $0x138] sm:$0xff]
    %v90 = vld [vmem:[#allocation6 + $0x140] sm:$0xff]
    %v91 = vld [vmem:[#allocation6 + $0x148] sm:$0xff]
    %v92 = vld [vmem:[#allocation6 + $0x150] sm:$0xff]
    %v93 = vld [vmem:[#allocation6 + $0x158] sm:$0xff]
    %v94 = vld [vmem:[#allocation6 + $0x160] sm:$0xff]
    %v95 = vld [vmem:[#allocation6 + $0x168] sm:$0xff]
    %v96 = vld [vmem:[#allocation6 + $0x170] sm:$0xff]
    %v97 = vld [vmem:[#allocation6 + $0x178] sm:$0xff]
    %v98 = vld [vmem:[#allocation6 + $0x180] sm:$0xff]
    %v99 = vld [vmem:[#allocation6 + $0x188] sm:$0xff]
    %v100 = vld [vmem:[#allocation6 + $0x190] sm:$0xff]
    %v101 = vld [vmem:[#allocation6 + $0x198] sm:$0xff]
    %v102 = vld [vmem:[#allocation6 + $0x1a0] sm:$0xff]
    %v103 = vld [vmem:[#allocation6 + $0x1a8] sm:$0xff]
    %v104 = vld [vmem:[#allocation6 + $0x1b0] sm:$0xff]
    %v105 = vld [vmem:[#allocation6 + $0x1b8] sm:$0xff]
    %v106 = vld [vmem:[#allocation6 + $0x1c0] sm:$0xff]
    %v107 = vld [vmem:[#allocation6 + $0x1c8] sm:$0xff]
    %v108 = vld [vmem:[#allocation6 + $0x1d0] sm:$0xff]
    %v109 = vld [vmem:[#allocation6 + $0x1d8] sm:$0xff]
    %v110 = vld [vmem:[#allocation6 + $0x1e0] sm:$0xff]
    %v111 = vld [vmem:[#allocation6 + $0x1e8] sm:$0xff]
    %v112 = vld [vmem:[#allocation6 + $0x1f0] sm:$0xff]
    %v113 = vld [vmem:[#allocation6 + $0x1f8] sm:$0xff]
    %v114 = vld [vmem:[#allocation6 + $0x200] sm:$0xff]
    %v115 = vld [vmem:[#allocation6 + $0x208] sm:$0xff]
    %v116 = vld [vmem:[#allocation6 + $0x210] sm:$0xff]
    %v117 = vld [vmem:[#allocation6 + $0x218] sm:$0xff]
    %v118 = vld [vmem:[#allocation6 + $0x220] sm:$0xff]
    %v119 = vld [vmem:[#allocation6 + $0x228] sm:$0xff]
    %v120 = vld [vmem:[#allocation6 + $0x230] sm:$0xff]
    %v121 = vld [vmem:[#allocation6 + $0x238] sm:$0xff]
    %v122 = vld [vmem:[#allocation6 + $0x240] sm:$0xff]
    %v123 = vld [vmem:[#allocation6 + $0x248] sm:$0xff]
    %v124 = vld [vmem:[#allocation6 + $0x250] sm:$0xff]
    %v125 = vld [vmem:[#allocation6 + $0x258] sm:$0xff]
    %v126 = vld [vmem:[#allocation6 + $0x260] sm:$0xff]
    %v127 = vld [vmem:[#allocation6 + $0x268] sm:$0xff]
    %v128 = vld [vmem:[#allocation6 + $0x270] sm:$0xff]
    %v129 = vld [vmem:[#allocation6 + $0x278] sm:$0xff]
    %v130 = vld [vmem:[#allocation6 + $0x280] sm:$0xff]
    %v131 = vld [vmem:[#allocation6 + $0x288] sm:$0xff]
    %v132 = vld [vmem:[#allocation6 + $0x290] sm:$0xff]
    %v133 = vld [vmem:[#allocation6 + $0x298] sm:$0xff]
    %v134 = vld [vmem:[#allocation6 + $0x2a0] sm:$0xff]
    %v135 = vld [vmem:[#allocation6 + $0x2a8] sm:$0xff]
    %v136 = vld [vmem:[#allocation6 + $0x2b0] sm:$0xff]
    %v137 = vld [vmem:[#allocation6 + $0x2b8] sm:$0xff]
    %v138 = vld [vmem:[#allocation6 + $0x2c0] sm:$0xff]
    %v139 = vld [vmem:[#allocation6 + $0x2c8] sm:$0xff]
    %v140 = vld [vmem:[#allocation6 + $0x2d0] sm:$0xff]
    %v141 = vld [vmem:[#allocation6 + $0x2d8] sm:$0xff]
    %v142 = vld [vmem:[#allocation6 + $0x2e0] sm:$0xff]
    %v143 = vld [vmem:[#allocation6 + $0x2e8] sm:$0xff]
    %v144 = vld [vmem:[#allocation6 + $0x2f0] sm:$0xff]
    %v145 = vld [vmem:[#allocation6 + $0x2f8] sm:$0xff]
    %v146 = vld [vmem:[#allocation6 + $0x300] sm:$0xff]
    %v147 = vld [vmem:[#allocation6 + $0x308] sm:$0xff]
    %v148 = vld [vmem:[#allocation6 + $0x310] sm:$0xff]
    %v149 = vld [vmem:[#allocation6 + $0x318] sm:$0xff]
    %v150 = vld [vmem:[#allocation6 + $0x320] sm:$0xff]
    %v151 = vld [vmem:[#allocation6 + $0x328] sm:$0xff]
    %v152 = vld [vmem:[#allocation6 + $0x330] sm:$0xff]
    %v153 = vld [vmem:[#allocation6 + $0x338] sm:$0xff]
    %v154 = vld [vmem:[#allocation6 + $0x340] sm:$0xff]
    %v155 = vld [vmem:[#allocation6 + $0x348] sm:$0xff]
    %v156 = vld [vmem:[#allocation6 + $0x350] sm:$0xff]
    %v157 = vld [vmem:[#allocation6 + $0x358] sm:$0xff]
    %v158 = vld [vmem:[#allocation6 + $0x360] sm:$0xff]
    %v159 = vld [vmem:[#allocation6 + $0x368] sm:$0xff]
    %v160 = vld [vmem:[#allocation6 + $0x370] sm:$0xff]
    %v161 = vld [vmem:[#allocation6 + $0x378] sm:$0xff]
    %v162 = vld [vmem:[#allocation6 + $0x380] sm:$0xff]
    %v163 = vld [vmem:[#allocation6 + $0x388] sm:$0xff]
    %v164 = vld [vmem:[#allocation6 + $0x390] sm:$0xff]
    %v165 = vld [vmem:[#allocation6 + $0x398] sm:$0xff]
    %v166 = vld [vmem:[#allocation6 + $0x3a0] sm:$0xff]
    %v167 = vld [vmem:[#allocation6 + $0x3a8] sm:$0xff]
    %v168 = vld [vmem:[#allocation6 + $0x3b0] sm:$0xff]
    %v169 = vld [vmem:[#allocation6 + $0x3b8] sm:$0xff]
    %v170 = vld [vmem:[#allocation6 + $0x3c0] sm:$0xff]
    %v171 = vld [vmem:[#allocation6 + $0x3c8] sm:$0xff]
    %v172 = vld [vmem:[#allocation6 + $0x3d0] sm:$0xff]
    %v173 = vld [vmem:[#allocation6 + $0x3d8] sm:$0xff]
    %v174 = vld [vmem:[#allocation6 + $0x3e0] sm:$0xff]
    %v175 = vld [vmem:[#allocation6 + $0x3e8] sm:$0xff]
    %v176 = vld [vmem:[#allocation6 + $0x3f0] sm:$0xff]
    %v177 = vld [vmem:[#allocation6 + $0x3f8] sm:$0xff]
    %v178 = vld [vmem:[#allocation6 + $0x400] sm:$0xff]
    %v179 = vld [vmem:[#allocation6 + $0x408] sm:$0xff]
    %v180 = vld [vmem:[#allocation6 + $0x410] sm:$0xff]
    %v181 = vld [vmem:[#allocation6 + $0x418] sm:$0xff]
    %v182 = vld [vmem:[#allocation6 + $0x420] sm:$0xff]
    %v183 = vld [vmem:[#allocation6 + $0x428] sm:$0xff]
    %v184 = vld [vmem:[#allocation6 + $0x430] sm:$0xff]
    %v185 = vld [vmem:[#allocation6 + $0x438] sm:$0xff]
    %v186 = vld [vmem:[#allocation6 + $0x440] sm:$0xff]
    %v187 = vld [vmem:[#allocation6 + $0x448] sm:$0xff]
    %v188 = vld [vmem:[#allocation6 + $0x450] sm:$0xff]
    %v189 = vld [vmem:[#allocation6 + $0x458] sm:$0xff]
    %v190 = vld [vmem:[#allocation6 + $0x460] sm:$0xff]
    %v191 = vld [vmem:[#allocation6 + $0x468] sm:$0xff]
    %v192 = vld [vmem:[#allocation6 + $0x470] sm:$0xff]
    %v193 = vld [vmem:[#allocation6 + $0x478] sm:$0xff]
    %v194 = vld [vmem:[#allocation6 + $0x480] sm:$0xff]
    %v195 = vld [vmem:[#allocation6 + $0x488] sm:$0xff]
    %v196 = vld [vmem:[#allocation6 + $0x490] sm:$0xff]
    %v197 = vld [vmem:[#allocation6 + $0x498] sm:$0xff]
    %v198 = vld [vmem:[#allocation6 + $0x4a0] sm:$0xff]
    %v199 = vld [vmem:[#allocation6 + $0x4a8] sm:$0xff]
    %v200 = vld [vmem:[#allocation6 + $0x4b0] sm:$0xff]
    %v201 = vld [vmem:[#allocation6 + $0x4b8] sm:$0xff]
    %v202 = vld [vmem:[#allocation6 + $0x4c0] sm:$0xff]
    %v203 = vld [vmem:[#allocation6 + $0x4c8] sm:$0xff]
    %v204 = vld [vmem:[#allocation6 + $0x4d0] sm:$0xff]
    %v205 = vld [vmem:[#allocation6 + $0x4d8] sm:$0xff]
    %v206 = vld [vmem:[#allocation6 + $0x4e0] sm:$0xff]
    %v207 = vld [vmem:[#allocation6 + $0x4e8] sm:$0xff]
    %v208 = vld [vmem:[#allocation6 + $0x4f0] sm:$0xff]
    %v209 = vld [vmem:[#allocation6 + $0x4f8] sm:$0xff]
    %v210 = vld [vmem:[#allocation6 + $0x500] sm:$0xff]
    %v211 = vld [vmem:[#allocation6 + $0x508] sm:$0xff]
    %v212 = vld [vmem:[#allocation6 + $0x510] sm:$0xff]
    %v213 = vld [vmem:[#allocation6 + $0x518] sm:$0xff]
    %v214 = vld [vmem:[#allocation6 + $0x520] sm:$0xff]
    %v215 = vld [vmem:[#allocation6 + $0x528] sm:$0xff]
    %v216 = vld [vmem:[#allocation6 + $0x530] sm:$0xff]
    %v217 = vld [vmem:[#allocation6 + $0x538] sm:$0xff]
    %v218 = vld [vmem:[#allocation6 + $0x540] sm:$0xff]
    %v219 = vld [vmem:[#allocation6 + $0x548] sm:$0xff]
    %v220 = vld [vmem:[#allocation6 + $0x550] sm:$0xff]
    %v221 = vld [vmem:[#allocation6 + $0x558] sm:$0xff]
    %v222 = vld [vmem:[#allocation6 + $0x560] sm:$0xff]
    %v223 = vld [vmem:[#allocation6 + $0x568] sm:$0xff]
    %v224 = vld [vmem:[#allocation6 + $0x570] sm:$0xff]
    %v225 = vld [vmem:[#allocation6 + $0x578] sm:$0xff]
    %v226 = vld [vmem:[#allocation6 + $0x580] sm:$0xff]
    %v227 = vld [vmem:[#allocation6 + $0x588] sm:$0xff]
    %v228 = vld [vmem:[#allocation6 + $0x590] sm:$0xff]
    %v229 = vld [vmem:[#allocation6 + $0x598] sm:$0xff]
    %v230 = vld [vmem:[#allocation6 + $0x5a0] sm:$0xff]
    %v231 = vld [vmem:[#allocation6 + $0x5a8] sm:$0xff]
    %v232 = vld [vmem:[#allocation6 + $0x5b0] sm:$0xff]
    %v233 = vld [vmem:[#allocation6 + $0x5b8] sm:$0xff]
    %v234 = vld [vmem:[#allocation6 + $0x5c0] sm:$0xff]
    %v235 = vld [vmem:[#allocation6 + $0x5c8] sm:$0xff]
    %v236 = vld [vmem:[#allocation6 + $0x5d0] sm:$0xff]
    %v237 = vld [vmem:[#allocation6 + $0x5d8] sm:$0xff]
    %v238 = vld [vmem:[#allocation6 + $0x5e0] sm:$0xff]
    %v239 = vld [vmem:[#allocation6 + $0x5e8] sm:$0xff]
    %v240 = vld [vmem:[#allocation6 + $0x5f0] sm:$0xff]
    %v241 = vld [vmem:[#allocation6 + $0x5f8] sm:$0xff]
    %v242 = vld [vmem:[#allocation6 + $0x600] sm:$0xff]
    %v243 = vld [vmem:[#allocation6 + $0x608] sm:$0xff]
    %v244 = vld [vmem:[#allocation6 + $0x610] sm:$0xff]
    %v245 = vld [vmem:[#allocation6 + $0x618] sm:$0xff]
    %v246 = vld [vmem:[#allocation6 + $0x620] sm:$0xff]
    %v247 = vld [vmem:[#allocation6 + $0x628] sm:$0xff]
    %v248 = vld [vmem:[#allocation6 + $0x630] sm:$0xff]
    %v249 = vld [vmem:[#allocation6 + $0x638] sm:$0xff]
    %v250 = vld [vmem:[#allocation6 + $0x640] sm:$0xff]
    %v251 = vld [vmem:[#allocation6 + $0x648] sm:$0xff]
    %v252 = vld [vmem:[#allocation6 + $0x650] sm:$0xff]
    %v253 = vld [vmem:[#allocation6 + $0x658] sm:$0xff]
    %v254 = vld [vmem:[#allocation6 + $0x660] sm:$0xff]
    %v255 = vld [vmem:[#allocation6 + $0x668] sm:$0xff]
    %v256 = vld [vmem:[#allocation6 + $0x670] sm:$0xff]
    %v257 = vld [vmem:[#allocation6 + $0x678] sm:$0xff]
    %v258 = vld [vmem:[#allocation6 + $0x680] sm:$0xff]
    %v259 = vld [vmem:[#allocation6 + $0x688] sm:$0xff]
    %v260 = vld [vmem:[#allocation6 + $0x690] sm:$0xff]
    %v261 = vld [vmem:[#allocation6 + $0x698] sm:$0xff]
    %v262 = vld [vmem:[#allocation6 + $0x6a0] sm:$0xff]
    %v263 = vld [vmem:[#allocation6 + $0x6a8] sm:$0xff]
    %v264 = vld [vmem:[#allocation6 + $0x6b0] sm:$0xff]
    %v265 = vld [vmem:[#allocation6 + $0x6b8] sm:$0xff]
    %v266 = vld [vmem:[#allocation6 + $0x6c0] sm:$0xff]
    %v267 = vld [vmem:[#allocation6 + $0x6c8] sm:$0xff]
    %v268 = vld [vmem:[#allocation6 + $0x6d0] sm:$0xff]
    %v269 = vld [vmem:[#allocation6 + $0x6d8] sm:$0xff]
    %v270 = vld [vmem:[#allocation6 + $0x6e0] sm:$0xff]
    %v271 = vld [vmem:[#allocation6 + $0x6e8] sm:$0xff]
    %v272 = vld [vmem:[#allocation6 + $0x6f0] sm:$0xff]
    %v273 = vld [vmem:[#allocation6 + $0x6f8] sm:$0xff]
    %v274 = vld [vmem:[#allocation6 + $0x700] sm:$0xff]
    %v275 = vld [vmem:[#allocation6 + $0x708] sm:$0xff]
    %v276 = vld [vmem:[#allocation6 + $0x710] sm:$0xff]
    %v277 = vld [vmem:[#allocation6 + $0x718] sm:$0xff]
    %v278 = vld [vmem:[#allocation6 + $0x720] sm:$0xff]
    %v279 = vld [vmem:[#allocation6 + $0x728] sm:$0xff]
    %v280 = vld [vmem:[#allocation6 + $0x730] sm:$0xff]
    %v281 = vld [vmem:[#allocation6 + $0x738] sm:$0xff]
    %v282 = vld [vmem:[#allocation6 + $0x740] sm:$0xff]
    %v283 = vld [vmem:[#allocation6 + $0x748] sm:$0xff]
    %v284 = vld [vmem:[#allocation6 + $0x750] sm:$0xff]
    %v285 = vld [vmem:[#allocation6 + $0x758] sm:$0xff]
    %v286 = vld [vmem:[#allocation6 + $0x760] sm:$0xff]
    %v287 = vld [vmem:[#allocation6 + $0x768] sm:$0xff]
    %v288 = vld [vmem:[#allocation6 + $0x770] sm:$0xff]
    %v289 = vld [vmem:[#allocation6 + $0x778] sm:$0xff]
    %v290 = vld [vmem:[#allocation6 + $0x780] sm:$0xff]
    %v291 = vld [vmem:[#allocation6 + $0x788] sm:$0xff]
    %v292 = vld [vmem:[#allocation6 + $0x790] sm:$0xff]
    %v293 = vld [vmem:[#allocation6 + $0x798] sm:$0xff]
    %v294 = vld [vmem:[#allocation6 + $0x7a0] sm:$0xff]
    %v295 = vld [vmem:[#allocation6 + $0x7a8] sm:$0xff]
    %v296 = vld [vmem:[#allocation6 + $0x7b0] sm:$0xff]
    %v297 = vld [vmem:[#allocation6 + $0x7b8] sm:$0xff]
    %v298 = vld [vmem:[#allocation6 + $0x7c0] sm:$0xff]
    %v299 = vld [vmem:[#allocation6 + $0x7c8] sm:$0xff]
    %v300 = vld [vmem:[#allocation6 + $0x7d0] sm:$0xff]
    %v301 = vld [vmem:[#allocation6 + $0x7d8] sm:$0xff]
    %v302 = vld [vmem:[#allocation6 + $0x7e0] sm:$0xff]
    %v303 = vld [vmem:[#allocation6 + $0x7e8] sm:$0xff]
    %v304 = vld [vmem:[#allocation6 + $0x7f0] sm:$0xff]
    %v305 = vld [vmem:[#allocation6 + $0x7f8] sm:$0xff]
    %v306 = vld [vmem:[#allocation6 + $0x800] sm:$0xff]
    %v307 = vld [vmem:[#allocation6 + $0x808] sm:$0xff]
    %v308 = vld [vmem:[#allocation6 + $0x810] sm:$0xff]
    %v309 = vld [vmem:[#allocation6 + $0x818] sm:$0xff]
    %v310 = vld [vmem:[#allocation6 + $0x820] sm:$0xff]
    %v311 = vld [vmem:[#allocation6 + $0x828] sm:$0xff]
    %v312 = vld [vmem:[#allocation6 + $0x830] sm:$0xff]
    %v313 = vld [vmem:[#allocation6 + $0x838] sm:$0xff]
    %v314 = vld [vmem:[#allocation6 + $0x840] sm:$0xff]
    %v315 = vld [vmem:[#allocation6 + $0x848] sm:$0xff]
    %v316 = vld [vmem:[#allocation6 + $0x850] sm:$0xff]
    %v317 = vld [vmem:[#allocation6 + $0x858] sm:$0xff]
    %v318 = vld [vmem:[#allocation6 + $0x860] sm:$0xff]
    %v319 = vld [vmem:[#allocation6 + $0x868] sm:$0xff]
    %v320 = vld [vmem:[#allocation6 + $0x870] sm:$0xff]
    %v321 = vld [vmem:[#allocation6 + $0x878] sm:$0xff]
    %v322 = vld [vmem:[#allocation6 + $0x880] sm:$0xff]
    %v323 = vld [vmem:[#allocation6 + $0x888] sm:$0xff]
    %v324 = vld [vmem:[#allocation6 + $0x890] sm:$0xff]
    %v325 = vld [vmem:[#allocation6 + $0x898] sm:$0xff]
    %v326 = vld [vmem:[#allocation6 + $0x8a0] sm:$0xff]
    %v327 = vld [vmem:[#allocation6 + $0x8a8] sm:$0xff]
    %v328 = vld [vmem:[#allocation6 + $0x8b0] sm:$0xff]
    %v329 = vld [vmem:[#allocation6 + $0x8b8] sm:$0xff]
    %v330 = vld [vmem:[#allocation6 + $0x8c0] sm:$0xff]
    %v331 = vld [vmem:[#allocation6 + $0x8c8] sm:$0xff]
    %v332 = vld [vmem:[#allocation6 + $0x8d0] sm:$0xff]
    %v333 = vld [vmem:[#allocation6 + $0x8d8] sm:$0xff]
    %v334 = vld [vmem:[#allocation6 + $0x8e0] sm:$0xff]
    %v335 = vld [vmem:[#allocation6 + $0x8e8] sm:$0xff]
    %v336 = vld [vmem:[#allocation6 + $0x8f0] sm:$0xff]
    %v337 = vld [vmem:[#allocation6 + $0x8f8] sm:$0xff]
    %v338 = vld [vmem:[#allocation6 + $0x900] sm:$0xff]
    %v339 = vld [vmem:[#allocation6 + $0x908] sm:$0xff]
    %v340 = vld [vmem:[#allocation6 + $0x910] sm:$0xff]
    %v341 = vld [vmem:[#allocation6 + $0x918] sm:$0xff]
    %v342 = vld [vmem:[#allocation6 + $0x920] sm:$0xff]
    %v343 = vld [vmem:[#allocation6 + $0x928] sm:$0xff]
    %v344 = vld [vmem:[#allocation6 + $0x930] sm:$0xff]
    %v345 = vld [vmem:[#allocation6 + $0x938] sm:$0xff]
    %v346 = vld [vmem:[#allocation6 + $0x940] sm:$0xff]
    %v347 = vld [vmem:[#allocation6 + $0x948] sm:$0xff]
    %v348 = vld [vmem:[#allocation6 + $0x950] sm:$0xff]
    %v349 = vld [vmem:[#allocation6 + $0x958] sm:$0xff]
    %v350 = vld [vmem:[#allocation6 + $0x960] sm:$0xff]
    %v351 = vld [vmem:[#allocation6 + $0x968] sm:$0xff]
    %v352 = vld [vmem:[#allocation6 + $0x970] sm:$0xff]
    %v353 = vld [vmem:[#allocation6 + $0x978] sm:$0xff]
    %v354 = vld [vmem:[#allocation6 + $0x980] sm:$0xff]
    %v355 = vld [vmem:[#allocation6 + $0x988] sm:$0xff]
    %v356 = vld [vmem:[#allocation6 + $0x990] sm:$0xff]
    %v357 = vld [vmem:[#allocation6 + $0x998] sm:$0xff]
    %v358 = vld [vmem:[#allocation6 + $0x9a0] sm:$0xff]
    %v359 = vld [vmem:[#allocation6 + $0x9a8] sm:$0xff]
    %v360 = vld [vmem:[#allocation6 + $0x9b0] sm:$0xff]
    %v361 = vld [vmem:[#allocation6 + $0x9b8] sm:$0xff]
    %v362 = vld [vmem:[#allocation6 + $0x9c0] sm:$0xff]
    %v363 = vld [vmem:[#allocation6 + $0x9c8] sm:$0xff]
    %v364 = vld [vmem:[#allocation6 + $0x9d0] sm:$0xff]
    %v365 = vld [vmem:[#allocation6 + $0x9d8] sm:$0xff]
    %v366 = vld [vmem:[#allocation6 + $0x9e0] sm:$0xff]
    %v367 = vld [vmem:[#allocation6 + $0x9e8] sm:$0xff]
    %v368 = vld [vmem:[#allocation6 + $0x9f0] sm:$0xff]
    %v369 = vld [vmem:[#allocation6 + $0x9f8] sm:$0xff]
    %v370 = vld [vmem:[#allocation6 + $0xa00] sm:$0xff]
    %v371 = vld [vmem:[#allocation6 + $0xa08] sm:$0xff]
    %v372 = vld [vmem:[#allocation6 + $0xa10] sm:$0xff]
    %v373 = vld [vmem:[#allocation6 + $0xa18] sm:$0xff]
    %v374 = vld [vmem:[#allocation6 + $0xa20] sm:$0xff]
    %v375 = vld [vmem:[#allocation6 + $0xa28] sm:$0xff]
    %v376 = vld [vmem:[#allocation6 + $0xa30] sm:$0xff]
    %v377 = vld [vmem:[#allocation6 + $0xa38] sm:$0xff]
    %v378 = vld [vmem:[#allocation6 + $0xa40] sm:$0xff]
    %v379 = vld [vmem:[#allocation6 + $0xa48] sm:$0xff]
    %v380 = vld [vmem:[#allocation6 + $0xa50] sm:$0xff]
    %v381 = vld [vmem:[#allocation6 + $0xa58] sm:$0xff]
    %v382 = vld [vmem:[#allocation6 + $0xa60] sm:$0xff]
    %v383 = vld [vmem:[#allocation6 + $0xa68] sm:$0xff]
    %v384 = vld [vmem:[#allocation6 + $0xa70] sm:$0xff]
    %v385 = vld [vmem:[#allocation6 + $0xa78] sm:$0xff]
    %v386 = vld [vmem:[#allocation6 + $0xa80] sm:$0xff]
    %v387 = vld [vmem:[#allocation6 + $0xa88] sm:$0xff]
    %v388 = vld [vmem:[#allocation6 + $0xa90] sm:$0xff]
    %v389 = vld [vmem:[#allocation6 + $0xa98] sm:$0xff]
    %v390 = vld [vmem:[#allocation6 + $0xaa0] sm:$0xff]
    %v391 = vld [vmem:[#allocation6 + $0xaa8] sm:$0xff]
    %v392 = vld [vmem:[#allocation6 + $0xab0] sm:$0xff]
    %v393 = vld [vmem:[#allocation6 + $0xab8] sm:$0xff]
    %v394 = vld [vmem:[#allocation6 + $0xac0] sm:$0xff]
    %v395 = vld [vmem:[#allocation6 + $0xac8] sm:$0xff]
    %v396 = vld [vmem:[#allocation6 + $0xad0] sm:$0xff]
    %v397 = vld [vmem:[#allocation6 + $0xad8] sm:$0xff]
    %v398 = vld [vmem:[#allocation6 + $0xae0] sm:$0xff]
    %v399 = vld [vmem:[#allocation6 + $0xae8] sm:$0xff]
    %v400 = vld [vmem:[#allocation6 + $0xaf0] sm:$0xff]
    %v401 = vld [vmem:[#allocation6 + $0xaf8] sm:$0xff]
    %v402 = vld [vmem:[#allocation6 + $0xb00] sm:$0xff]
    %v403 = vld [vmem:[#allocation6 + $0xb08] sm:$0xff]
    %v404 = vld [vmem:[#allocation6 + $0xb10] sm:$0xff]
    %v405 = vld [vmem:[#allocation6 + $0xb18] sm:$0xff]
    %v406 = vld [vmem:[#allocation6 + $0xb20] sm:$0xff]
    %v407 = vld [vmem:[#allocation6 + $0xb28] sm:$0xff]
    %v408 = vld [vmem:[#allocation6 + $0xb30] sm:$0xff]
    %v409 = vld [vmem:[#allocation6 + $0xb38] sm:$0xff]
    %v410 = vld [vmem:[#allocation6 + $0xb40] sm:$0xff]
    %v411 = vld [vmem:[#allocation6 + $0xb48] sm:$0xff]
    %v412 = vld [vmem:[#allocation6 + $0xb50] sm:$0xff]
    %v413 = vld [vmem:[#allocation6 + $0xb58] sm:$0xff]
    %v414 = vld [vmem:[#allocation6 + $0xb60] sm:$0xff]
    %v415 = vld [vmem:[#allocation6 + $0xb68] sm:$0xff]
    %v416 = vld [vmem:[#allocation6 + $0xb70] sm:$0xff]
    %v417 = vld [vmem:[#allocation6 + $0xb78] sm:$0xff]
    %v418 = vld [vmem:[#allocation6 + $0xb80] sm:$0xff]
    %v419 = vld [vmem:[#allocation6 + $0xb88] sm:$0xff]
    %v420 = vld [vmem:[#allocation6 + $0xb90] sm:$0xff]
    %v421 = vld [vmem:[#allocation6 + $0xb98] sm:$0xff]
    %v422 = vld [vmem:[#allocation6 + $0xba0] sm:$0xff]
    %v423 = vld [vmem:[#allocation6 + $0xba8] sm:$0xff]
    %v424 = vld [vmem:[#allocation6 + $0xbb0] sm:$0xff]
    %v425 = vld [vmem:[#allocation6 + $0xbb8] sm:$0xff]
    %v426 = vld [vmem:[#allocation6 + $0xbc0] sm:$0xff]
    %v427 = vld [vmem:[#allocation6 + $0xbc8] sm:$0xff]
    %v428 = vld [vmem:[#allocation6 + $0xbd0] sm:$0xff]
    %v429 = vld [vmem:[#allocation6 + $0xbd8] sm:$0xff]
    %v430 = vld [vmem:[#allocation6 + $0xbe0] sm:$0xff]
    %v431 = vld [vmem:[#allocation6 + $0xbe8] sm:$0xff]
    %v432 = vld [vmem:[#allocation6 + $0xbf0] sm:$0xff]
    %v433 = vld [vmem:[#allocation6 + $0xbf8] sm:$0xff]
    %v434 = vld [vmem:[#allocation6 + $0xc00] sm:$0xff]
    %v435 = vld [vmem:[#allocation6 + $0xc08] sm:$0xff]
    %v436 = vld [vmem:[#allocation6 + $0xc10] sm:$0xff]
    %v437 = vld [vmem:[#allocation6 + $0xc18] sm:$0xff]
    %v438 = vld [vmem:[#allocation6 + $0xc20] sm:$0xff]
    %v439 = vld [vmem:[#allocation6 + $0xc28] sm:$0xff]
    %v440 = vld [vmem:[#allocation6 + $0xc30] sm:$0xff]
    %v441 = vld [vmem:[#allocation6 + $0xc38] sm:$0xff]
    %v442 = vld [vmem:[#allocation6 + $0xc40] sm:$0xff]
    %v443 = vld [vmem:[#allocation6 + $0xc48] sm:$0xff]
    %v444 = vld [vmem:[#allocation6 + $0xc50] sm:$0xff]
    %v445 = vld [vmem:[#allocation6 + $0xc58] sm:$0xff]
    %v446 = vld [vmem:[#allocation6 + $0xc60] sm:$0xff]
    %v447 = vld [vmem:[#allocation6 + $0xc68] sm:$0xff]
    %v448 = vld [vmem:[#allocation6 + $0xc70] sm:$0xff]
    %v449 = vld [vmem:[#allocation6 + $0xc78] sm:$0xff]
    %v450 = vld [vmem:[#allocation6 + $0xc80] sm:$0xff]
    %v451 = vld [vmem:[#allocation6 + $0xc88] sm:$0xff]
    %v452 = vld [vmem:[#allocation6 + $0xc90] sm:$0xff]
    %v453 = vld [vmem:[#allocation6 + $0xc98] sm:$0xff]
    %v454 = vld [vmem:[#allocation6 + $0xca0] sm:$0xff]
    %v455 = vld [vmem:[#allocation6 + $0xca8] sm:$0xff]
    %v456 = vld [vmem:[#allocation6 + $0xcb0] sm:$0xff]
    %v457 = vld [vmem:[#allocation6 + $0xcb8] sm:$0xff]
    %v458 = vld [vmem:[#allocation6 + $0xcc0] sm:$0xff]
    %v459 = vld [vmem:[#allocation6 + $0xcc8] sm:$0xff]
    %v460 = vld [vmem:[#allocation6 + $0xcd0] sm:$0xff]
    %v461 = vld [vmem:[#allocation6 + $0xcd8] sm:$0xff]
    %v462 = vld [vmem:[#allocation6 + $0xce0] sm:$0xff]
    %v463 = vld [vmem:[#allocation6 + $0xce8] sm:$0xff]
    %v464 = vld [vmem:[#allocation6 + $0xcf0] sm:$0xff]
    %v465 = vld [vmem:[#allocation6 + $0xcf8] sm:$0xff]
    %v466 = vld [vmem:[#allocation6 + $0xd00] sm:$0xff]
    %v467 = vld [vmem:[#allocation6 + $0xd08] sm:$0xff]
    %v468 = vld [vmem:[#allocation6 + $0xd10] sm:$0xff]
    %v469 = vld [vmem:[#allocation6 + $0xd18] sm:$0xff]
    %v470 = vld [vmem:[#allocation6 + $0xd20] sm:$0xff]
    %v471 = vld [vmem:[#allocation6 + $0xd28] sm:$0xff]
    %v472 = vld [vmem:[#allocation6 + $0xd30] sm:$0xff]
    %v473 = vld [vmem:[#allocation6 + $0xd38] sm:$0xff]
    %v474 = vld [vmem:[#allocation6 + $0xd40] sm:$0xff]
    %v475 = vld [vmem:[#allocation6 + $0xd48] sm:$0xff]
    %v476 = vld [vmem:[#allocation6 + $0xd50] sm:$0xff]
    %v477 = vld [vmem:[#allocation6 + $0xd58] sm:$0xff]
    %v478 = vld [vmem:[#allocation6 + $0xd60] sm:$0xff]
    %v479 = vld [vmem:[#allocation6 + $0xd68] sm:$0xff]
    %v480 = vld [vmem:[#allocation6 + $0xd70] sm:$0xff]
    %v481 = vld [vmem:[#allocation6 + $0xd78] sm:$0xff]
    %v482 = vld [vmem:[#allocation6 + $0xd80] sm:$0xff]
    %v483 = vld [vmem:[#allocation6 + $0xd88] sm:$0xff]
    %v484 = vld [vmem:[#allocation6 + $0xd90] sm:$0xff]
    %v485 = vld [vmem:[#allocation6 + $0xd98] sm:$0xff]
    %v486 = vld [vmem:[#allocation6 + $0xda0] sm:$0xff]
    %v487 = vld [vmem:[#allocation6 + $0xda8] sm:$0xff]
    %v488 = vld [vmem:[#allocation6 + $0xdb0] sm:$0xff]
    %v489 = vld [vmem:[#allocation6 + $0xdb8] sm:$0xff]
    %v490 = vld [vmem:[#allocation6 + $0xdc0] sm:$0xff]
    %v491 = vld [vmem:[#allocation6 + $0xdc8] sm:$0xff]
    %v492 = vld [vmem:[#allocation6 + $0xdd0] sm:$0xff]
    %v493 = vld [vmem:[#allocation6 + $0xdd8] sm:$0xff]
    %v494 = vld [vmem:[#allocation6 + $0xde0] sm:$0xff]
    %v495 = vld [vmem:[#allocation6 + $0xde8] sm:$0xff]
    %v496 = vld [vmem:[#allocation6 + $0xdf0] sm:$0xff]
    %v497 = vld [vmem:[#allocation6 + $0xdf8] sm:$0xff]
    %v498 = vld [vmem:[#allocation6 + $0xe00] sm:$0xff]
    %v499 = vld [vmem:[#allocation6 + $0xe08] sm:$0xff]
    %v500 = vld [vmem:[#allocation6 + $0xe10] sm:$0xff]
    %v501 = vld [vmem:[#allocation6 + $0xe18] sm:$0xff]
    %v502 = vld [vmem:[#allocation6 + $0xe20] sm:$0xff]
    %v503 = vld [vmem:[#allocation6 + $0xe28] sm:$0xff]
    %v504 = vld [vmem:[#allocation6 + $0xe30] sm:$0xff]
    %v505 = vld [vmem:[#allocation6 + $0xe38] sm:$0xff]
    %v506 = vld [vmem:[#allocation6 + $0xe40] sm:$0xff]
    %v507 = vld [vmem:[#allocation6 + $0xe48] sm:$0xff]
    %v508 = vld [vmem:[#allocation6 + $0xe50] sm:$0xff]
    %v509 = vld [vmem:[#allocation6 + $0xe58] sm:$0xff]
    %v510 = vld [vmem:[#allocation6 + $0xe60] sm:$0xff]
    %v511 = vld [vmem:[#allocation6 + $0xe68] sm:$0xff]
    %v512 = vld [vmem:[#allocation6 + $0xe70] sm:$0xff]
    %v513 = vld [vmem:[#allocation6 + $0xe78] sm:$0xff]
    %v514 = vld [vmem:[#allocation6 + $0xe80] sm:$0xff]
    %v515 = vld [vmem:[#allocation6 + $0xe88] sm:$0xff]
    %v516 = vld [vmem:[#allocation6 + $0xe90] sm:$0xff]
    %v517 = vld [vmem:[#allocation6 + $0xe98] sm:$0xff]
    %v518 = vld [vmem:[#allocation6 + $0xea0] sm:$0xff]
    %v519 = vld [vmem:[#allocation6 + $0xea8] sm:$0xff]
    %v520 = vld [vmem:[#allocation6 + $0xeb0] sm:$0xff]
    %v521 = vld [vmem:[#allocation6 + $0xeb8] sm:$0xff]
    %v522 = vld [vmem:[#allocation6 + $0xec0] sm:$0xff]
    %v523 = vld [vmem:[#allocation6 + $0xec8] sm:$0xff]
    %v524 = vld [vmem:[#allocation6 + $0xed0] sm:$0xff]
    %v525 = vld [vmem:[#allocation6 + $0xed8] sm:$0xff]
    %v526 = vld [vmem:[#allocation6 + $0xee0] sm:$0xff]
    %v527 = vld [vmem:[#allocation6 + $0xee8] sm:$0xff]
    %v528 = vld [vmem:[#allocation6 + $0xef0] sm:$0xff]
    %v529 = vld [vmem:[#allocation6 + $0xef8] sm:$0xff]
    %v530 = vld [vmem:[#allocation6 + $0xf00] sm:$0xff]
    %v531 = vld [vmem:[#allocation6 + $0xf08] sm:$0xff]
    %v532 = vld [vmem:[#allocation6 + $0xf10] sm:$0xff]
    %v533 = vld [vmem:[#allocation6 + $0xf18] sm:$0xff]
    %v534 = vld [vmem:[#allocation6 + $0xf20] sm:$0xff]
    %v535 = vld [vmem:[#allocation6 + $0xf28] sm:$0xff]
    %v536 = vld [vmem:[#allocation6 + $0xf30] sm:$0xff]
    %v537 = vld [vmem:[#allocation6 + $0xf38] sm:$0xff]
    %v538 = vld [vmem:[#allocation6 + $0xf40] sm:$0xff]
    %v539 = vld [vmem:[#allocation6 + $0xf48] sm:$0xff]
    %v540 = vld [vmem:[#allocation6 + $0xf50] sm:$0xff]
    %v541 = vld [vmem:[#allocation6 + $0xf58] sm:$0xff]
    %v542 = vld [vmem:[#allocation6 + $0xf60] sm:$0xff]
    %v543 = vld [vmem:[#allocation6 + $0xf68] sm:$0xff]
    %v544 = vld [vmem:[#allocation6 + $0xf70] sm:$0xff]
    %v545 = vld [vmem:[#allocation6 + $0xf78] sm:$0xff]
    %v546 = vld [vmem:[#allocation6 + $0xf80] sm:$0xff]
    %v547 = vld [vmem:[#allocation6 + $0xf88] sm:$0xff]
    %v548 = vld [vmem:[#allocation6 + $0xf90] sm:$0xff]
    %v549 = vld [vmem:[#allocation6 + $0xf98] sm:$0xff]
    %v550 = vld [vmem:[#allocation6 + $0xfa0] sm:$0xff]
    %v551 = vld [vmem:[#allocation6 + $0xfa8] sm:$0xff]
    %v552 = vld [vmem:[#allocation6 + $0xfb0] sm:$0xff]
    %v553 = vld [vmem:[#allocation6 + $0xfb8] sm:$0xff]
    %v554 = vld [vmem:[#allocation6 + $0xfc0] sm:$0xff]
    %v555 = vld [vmem:[#allocation6 + $0xfc8] sm:$0xff]
    %v556 = vld [vmem:[#allocation6 + $0xfd0] sm:$0xff]
    %v557 = vld [vmem:[#allocation6 + $0xfd8] sm:$0xff]
    %v558 = vld [vmem:[#allocation6 + $0xfe0] sm:$0xff]
    %v559 = vld [vmem:[#allocation6 + $0xfe8] sm:$0xff]
    %v560 = vld [vmem:[#allocation6 + $0xff0] sm:$0xff]
    %v561 = vld [vmem:[#allocation6 + $0xff8] sm:$0xff]
    %s562 = sld [smem:[#allocation2]]
    %v563 = vstv %s562
    %v572 = vcombine.high %v42, %v42
    %v574 = vunpack.c.l.s4 1983009808
    %v575 = vunpack.c.0.s8 %v574
    %v576 = vlaneseq
    %v577 = vshrl.u32 %v576, 7
    %v578 = vsub.s32 %v575, %v577
    %v579 = vrot.slane %v42, %v578
    %v581 = vunpack.c.l.s4 1983009808
    %v582 = vunpack.c.0.s8 %v581
    %v583 = vlaneseq
    %v584 = vshrl.u32 %v583, 7
    %v585 = vsub.s32 %v582, %v584
    %v586 = vrot.slane %v572, %v585
    %v587 = vcombine.high %v579, %v579
    %v588 = vcombine.high %v586, %v586
    %v589 = vcombine.high %v43, %v43
    %v591 = vunpack.c.l.s4 1983009808
    %v592 = vunpack.c.0.s8 %v591
    %v593 = vlaneseq
    %v594 = vshrl.u32 %v593, 7
    %v595 = vsub.s32 %v592, %v594
    %v596 = vrot.slane %v43, %v595
    %v598 = vunpack.c.l.s4 1983009808
    %v599 = vunpack.c.0.s8 %v598
    %v600 = vlaneseq
    %v601 = vshrl.u32 %v600, 7
    %v602 = vsub.s32 %v599, %v601
    %v603 = vrot.slane %v589, %v602
    %v604 = vcombine.high %v596, %v596
    %v605 = vcombine.high %v603, %v603
    %v606 = vcombine.high %v44, %v44
    %v608 = vunpack.c.l.s4 1983009808
    %v609 = vunpack.c.0.s8 %v608
    %v610 = vlaneseq
    %v611 = vshrl.u32 %v610, 7
    %v612 = vsub.s32 %v609, %v611
    %v613 = vrot.slane %v44, %v612
    %v615 = vunpack.c.l.s4 1983009808
    %v616 = vunpack.c.0.s8 %v615
    %v617 = vlaneseq
    %v618 = vshrl.u32 %v617, 7
    %v619 = vsub.s32 %v616, %v618
    %v620 = vrot.slane %v606, %v619
    %v621 = vcombine.high %v613, %v613
    %v622 = vcombine.high %v620, %v620
    %v623 = vcombine.high %v45, %v45
    %v625 = vunpack.c.l.s4 1983009808
    %v626 = vunpack.c.0.s8 %v625
    %v627 = vlaneseq
    %v628 = vshrl.u32 %v627, 7
    %v629 = vsub.s32 %v626, %v628
    %v630 = vrot.slane %v45, %v629
    %v632 = vunpack.c.l.s4 1983009808
    %v633 = vunpack.c.0.s8 %v632
    %v634 = vlaneseq
    %v635 = vshrl.u32 %v634, 7
    %v636 = vsub.s32 %v633, %v635
    %v637 = vrot.slane %v623, %v636
    %v638 = vcombine.high %v630, %v630
    %v639 = vcombine.high %v637, %v637
    %v640 = vcombine.high %v46, %v46
    %v642 = vunpack.c.l.s4 1983009808
    %v643 = vunpack.c.0.s8 %v642
    %v644 = vlaneseq
    %v645 = vshrl.u32 %v644, 7
    %v646 = vsub.s32 %v643, %v645
    %v647 = vrot.slane %v46, %v646
    %v649 = vunpack.c.l.s4 1983009808
    %v650 = vunpack.c.0.s8 %v649
    %v651 = vlaneseq
    %v652 = vshrl.u32 %v651, 7
    %v653 = vsub.s32 %v650, %v652
    %v654 = vrot.slane %v640, %v653
    %v655 = vcombine.high %v647, %v647
    %v656 = vcombine.high %v654, %v654
    %v657 = vcombine.high %v47, %v47
    %v659 = vunpack.c.l.s4 1983009808
    %v660 = vunpack.c.0.s8 %v659
    %v661 = vlaneseq
    %v662 = vshrl.u32 %v661, 7
    %v663 = vsub.s32 %v660, %v662
    %v664 = vrot.slane %v47, %v663
    %v666 = vunpack.c.l.s4 1983009808
    %v667 = vunpack.c.0.s8 %v666
    %v668 = vlaneseq
    %v669 = vshrl.u32 %v668, 7
    %v670 = vsub.s32 %v667, %v669
    %v671 = vrot.slane %v657, %v670
    %v672 = vcombine.high %v664, %v664
    %v673 = vcombine.high %v671, %v671
    %v674 = vcombine.high %v48, %v48
    %v676 = vunpack.c.l.s4 1983009808
    %v677 = vunpack.c.0.s8 %v676
    %v678 = vlaneseq
    %v679 = vshrl.u32 %v678, 7
    %v680 = vsub.s32 %v677, %v679
    %v681 = vrot.slane %v48, %v680
    %v683 = vunpack.c.l.s4 1983009808
    %v684 = vunpack.c.0.s8 %v683
    %v685 = vlaneseq
    %v686 = vshrl.u32 %v685, 7
    %v687 = vsub.s32 %v684, %v686
    %v688 = vrot.slane %v674, %v687
    %v689 = vcombine.high %v681, %v681
    %v690 = vcombine.high %v688, %v688
    %v691 = vcombine.high %v49, %v49
    %v693 = vunpack.c.l.s4 1983009808
    %v694 = vunpack.c.0.s8 %v693
    %v695 = vlaneseq
    %v696 = vshrl.u32 %v695, 7
    %v697 = vsub.s32 %v694, %v696
    %v698 = vrot.slane %v49, %v697
    %v700 = vunpack.c.l.s4 1983009808
    %v701 = vunpack.c.0.s8 %v700
    %v702 = vlaneseq
    %v703 = vshrl.u32 %v702, 7
    %v704 = vsub.s32 %v701, %v703
    %v705 = vrot.slane %v691, %v704
    %v706 = vcombine.high %v698, %v698
    %v707 = vcombine.high %v705, %v705
    %740 = vmatprep.subr.mxu0 0.0
    %741 = vmatpush1.msra.mxu0 %v50
    %742 = vmatprep.subr.mxu0 0.0
    %743 = vmatpush1.msra.mxu0 %v51
    %744 = vmatprep.subr.mxu0 0.0
    %745 = vmatpush1.msra.mxu0 %v52
    %746 = vmatprep.subr.mxu0 0.0
    %747 = vmatpush1.msra.mxu0 %v53
    %748 = vmatprep.subr.mxu0 0.0
    %749 = vmatpush1.msra.mxu0 %v54
    %750 = vmatprep.subr.mxu0 0.0
    %751 = vmatpush1.msra.mxu0 %v55
    %752 = vmatprep.subr.mxu0 0.0
    %753 = vmatpush1.msra.mxu0 %v56
    %754 = vmatprep.subr.mxu0 0.0
    %755 = vmatpush1.msra.mxu0 %v57
    %756 = vmatprep.subr.mxu0 0.0
    %757 = vmatpush1.msra.mxu0 %v58
    %758 = vmatprep.subr.mxu0 0.0
    %759 = vmatpush1.msra.mxu0 %v59
    %760 = vmatprep.subr.mxu0 0.0
    %761 = vmatpush1.msra.mxu0 %v60
    %762 = vmatprep.subr.mxu0 0.0
    %763 = vmatpush1.msra.mxu0 %v61
    %764 = vmatprep.subr.mxu0 0.0
    %765 = vmatpush1.msra.mxu0 %v62
    %766 = vmatprep.subr.mxu0 0.0
    %767 = vmatpush1.msra.mxu0 %v63
    %768 = vmatprep.subr.mxu0 0.0
    %769 = vmatpush1.msra.mxu0 %v64
    %770 = vmatprep.subr.mxu0 0.0
    %771 = vmatpush1.msra.mxu0 %v65
    %772 = vmatprep.subr.mxu0 0.0
    %773 = vmatpush1.msra.mxu0 %v66
    %774 = vmatprep.subr.mxu0 0.0
    %775 = vmatpush1.msra.mxu0 %v67
    %776 = vmatprep.subr.mxu0 0.0
    %777 = vmatpush1.msra.mxu0 %v68
    %778 = vmatprep.subr.mxu0 0.0
    %779 = vmatpush1.msra.mxu0 %v69
    %780 = vmatprep.subr.mxu0 0.0
    %781 = vmatpush1.msra.mxu0 %v70
    %782 = vmatprep.subr.mxu0 0.0
    %783 = vmatpush1.msra.mxu0 %v71
    %784 = vmatprep.subr.mxu0 0.0
    %785 = vmatpush1.msra.mxu0 %v72
    %786 = vmatprep.subr.mxu0 0.0
    %787 = vmatpush1.msra.mxu0 %v73
    %788 = vmatprep.subr.mxu0 0.0
    %789 = vmatpush1.msra.mxu0 %v74
    %790 = vmatprep.subr.mxu0 0.0
    %791 = vmatpush1.msra.mxu0 %v75
    %792 = vmatprep.subr.mxu0 0.0
    %793 = vmatpush1.msra.mxu0 %v76
    %794 = vmatprep.subr.mxu0 0.0
    %795 = vmatpush1.msra.mxu0 %v77
    %796 = vmatprep.subr.mxu0 0.0
    %797 = vmatpush1.msra.mxu0 %v78
    %798 = vmatprep.subr.mxu0 0.0
    %799 = vmatpush1.msra.mxu0 %v79
    %800 = vmatprep.subr.mxu0 0.0
    %801 = vmatpush1.msra.mxu0 %v80
    %802 = vmatprep.subr.mxu0 0.0
    %803 = vmatpush1.msra.mxu0 %v81
    %804 = vmatprep.mubr.f32.mxu0 %v587
    %805 = vmatmul.mubr.f32.gmra.mrb[0].mxu0 %v579
    %v806 = vpop.f32.mrb[0].mxu0
    %v807 = vadd.f32 %v563, %v806
    %v808 = vpop.f32.mrb[0].mxu0
    %809 = vdwg.mxu0
    %810 = vmatprep.subr.mxu0 0.0
    %811 = vmatpush1.msra.mxu0 %v82
    %812 = vmatprep.subr.mxu0 0.0
    %813 = vmatpush1.msra.mxu0 %v83
    %814 = vmatprep.subr.mxu0 0.0
    %815 = vmatpush1.msra.mxu0 %v84
    %816 = vmatprep.subr.mxu0 0.0
    %817 = vmatpush1.msra.mxu0 %v85
    %818 = vmatprep.subr.mxu0 0.0
    %819 = vmatpush1.msra.mxu0 %v86
    %820 = vmatprep.subr.mxu0 0.0
    %821 = vmatpush1.msra.mxu0 %v87
    %822 = vmatprep.subr.mxu0 0.0
    %823 = vmatpush1.msra.mxu0 %v88
    %824 = vmatprep.subr.mxu0 0.0
    %825 = vmatpush1.msra.mxu0 %v89
    %826 = vmatprep.subr.mxu0 0.0
    %827 = vmatpush1.msra.mxu0 %v90
    %828 = vmatprep.subr.mxu0 0.0
    %829 = vmatpush1.msra.mxu0 %v91
    %830 = vmatprep.subr.mxu0 0.0
    %831 = vmatpush1.msra.mxu0 %v92
    %832 = vmatprep.subr.mxu0 0.0
    %833 = vmatpush1.msra.mxu0 %v93
    %834 = vmatprep.subr.mxu0 0.0
    %835 = vmatpush1.msra.mxu0 %v94
    %836 = vmatprep.subr.mxu0 0.0
    %837 = vmatpush1.msra.mxu0 %v95
    %838 = vmatprep.subr.mxu0 0.0
    %839 = vmatpush1.msra.mxu0 %v96
    %840 = vmatprep.subr.mxu0 0.0
    %841 = vmatpush1.msra.mxu0 %v97
    %842 = vmatprep.subr.mxu0 0.0
    %843 = vmatpush1.msra.mxu0 %v98
    %844 = vmatprep.subr.mxu0 0.0
    %845 = vmatpush1.msra.mxu0 %v99
    %846 = vmatprep.subr.mxu0 0.0
    %847 = vmatpush1.msra.mxu0 %v100
    %848 = vmatprep.subr.mxu0 0.0
    %849 = vmatpush1.msra.mxu0 %v101
    %850 = vmatprep.subr.mxu0 0.0
    %851 = vmatpush1.msra.mxu0 %v102
    %852 = vmatprep.subr.mxu0 0.0
    %853 = vmatpush1.msra.mxu0 %v103
    %854 = vmatprep.subr.mxu0 0.0
    %855 = vmatpush1.msra.mxu0 %v104
    %856 = vmatprep.subr.mxu0 0.0
    %857 = vmatpush1.msra.mxu0 %v105
    %858 = vmatprep.subr.mxu0 0.0
    %859 = vmatpush1.msra.mxu0 %v106
    %860 = vmatprep.subr.mxu0 0.0
    %861 = vmatpush1.msra.mxu0 %v107
    %862 = vmatprep.subr.mxu0 0.0
    %863 = vmatpush1.msra.mxu0 %v108
    %864 = vmatprep.subr.mxu0 0.0
    %865 = vmatpush1.msra.mxu0 %v109
    %866 = vmatprep.subr.mxu0 0.0
    %867 = vmatpush1.msra.mxu0 %v110
    %868 = vmatprep.subr.mxu0 0.0
    %869 = vmatpush1.msra.mxu0 %v111
    %870 = vmatprep.subr.mxu0 0.0
    %871 = vmatpush1.msra.mxu0 %v112
    %872 = vmatprep.subr.mxu0 0.0
    %873 = vmatpush1.msra.mxu0 %v113
    %874 = vmatprep.mubr.f32.mxu0 %v588
    %875 = vmatmul.mubr.f32.gmra.mrb[0].mxu0 %v586
    %v876 = vpop.f32.mrb[0].mxu0
    %v877 = vadd.f32 %v807, %v876
    %v878 = vpop.f32.mrb[0].mxu0
    %879 = vdwg.mxu0
    %880 = vmatprep.subr.mxu0 0.0
    %881 = vmatpush1.msra.mxu0 %v114
    %882 = vmatprep.subr.mxu0 0.0
    %883 = vmatpush1.msra.mxu0 %v115
    %884 = vmatprep.subr.mxu0 0.0
    %885 = vmatpush1.msra.mxu0 %v116
    %886 = vmatprep.subr.mxu0 0.0
    %887 = vmatpush1.msra.mxu0 %v117
    %888 = vmatprep.subr.mxu0 0.0
    %889 = vmatpush1.msra.mxu0 %v118
    %890 = vmatprep.subr.mxu0 0.0
    %891 = vmatpush1.msra.mxu0 %v119
    %892 = vmatprep.subr.mxu0 0.0
    %893 = vmatpush1.msra.mxu0 %v120
    %894 = vmatprep.subr.mxu0 0.0
    %895 = vmatpush1.msra.mxu0 %v121
    %896 = vmatprep.subr.mxu0 0.0
    %897 = vmatpush1.msra.mxu0 %v122
    %898 = vmatprep.subr.mxu0 0.0
    %899 = vmatpush1.msra.mxu0 %v123
    %900 = vmatprep.subr.mxu0 0.0
    %901 = vmatpush1.msra.mxu0 %v124
    %902 = vmatprep.subr.mxu0 0.0
    %903 = vmatpush1.msra.mxu0 %v125
    %904 = vmatprep.subr.mxu0 0.0
    %905 = vmatpush1.msra.mxu0 %v126
    %906 = vmatprep.subr.mxu0 0.0
    %907 = vmatpush1.msra.mxu0 %v127
    %908 = vmatprep.subr.mxu0 0.0
    %909 = vmatpush1.msra.mxu0 %v128
    %910 = vmatprep.subr.mxu0 0.0
    %911 = vmatpush1.msra.mxu0 %v129
    %912 = vmatprep.subr.mxu0 0.0
    %913 = vmatpush1.msra.mxu0 %v130
    %914 = vmatprep.subr.mxu0 0.0
    %915 = vmatpush1.msra.mxu0 %v131
    %916 = vmatprep.subr.mxu0 0.0
    %917 = vmatpush1.msra.mxu0 %v132
    %918 = vmatprep.subr.mxu0 0.0
    %919 = vmatpush1.msra.mxu0 %v133
    %920 = vmatprep.subr.mxu0 0.0
    %921 = vmatpush1.msra.mxu0 %v134
    %922 = vmatprep.subr.mxu0 0.0
    %923 = vmatpush1.msra.mxu0 %v135
    %924 = vmatprep.subr.mxu0 0.0
    %925 = vmatpush1.msra.mxu0 %v136
    %926 = vmatprep.subr.mxu0 0.0
    %927 = vmatpush1.msra.mxu0 %v137
    %928 = vmatprep.subr.mxu0 0.0
    %929 = vmatpush1.msra.mxu0 %v138
    %930 = vmatprep.subr.mxu0 0.0
    %931 = vmatpush1.msra.mxu0 %v139
    %932 = vmatprep.subr.mxu0 0.0
    %933 = vmatpush1.msra.mxu0 %v140
    %934 = vmatprep.subr.mxu0 0.0
    %935 = vmatpush1.msra.mxu0 %v141
    %936 = vmatprep.subr.mxu0 0.0
    %937 = vmatpush1.msra.mxu0 %v142
    %938 = vmatprep.subr.mxu0 0.0
    %939 = vmatpush1.msra.mxu0 %v143
    %940 = vmatprep.subr.mxu0 0.0
    %941 = vmatpush1.msra.mxu0 %v144
    %942 = vmatprep.subr.mxu0 0.0
    %943 = vmatpush1.msra.mxu0 %v145
    %944 = vmatprep.mubr.f32.mxu0 %v604
    %945 = vmatmul.mubr.f32.gmra.mrb[0].mxu0 %v596
    %v946 = vpop.f32.mrb[0].mxu0
    %v947 = vadd.f32 %v877, %v946
    %v948 = vpop.f32.mrb[0].mxu0
    %949 = vdwg.mxu0
    %950 = vmatprep.subr.mxu0 0.0
    %951 = vmatpush1.msra.mxu0 %v146
    %952 = vmatprep.subr.mxu0 0.0
    %953 = vmatpush1.msra.mxu0 %v147
    %954 = vmatprep.subr.mxu0 0.0
    %955 = vmatpush1.msra.mxu0 %v148
    %956 = vmatprep.subr.mxu0 0.0
    %957 = vmatpush1.msra.mxu0 %v149
    %958 = vmatprep.subr.mxu0 0.0
    %959 = vmatpush1.msra.mxu0 %v150
    %960 = vmatprep.subr.mxu0 0.0
    %961 = vmatpush1.msra.mxu0 %v151
    %962 = vmatprep.subr.mxu0 0.0
    %963 = vmatpush1.msra.mxu0 %v152
    %964 = vmatprep.subr.mxu0 0.0
    %965 = vmatpush1.msra.mxu0 %v153
    %966 = vmatprep.subr.mxu0 0.0
    %967 = vmatpush1.msra.mxu0 %v154
    %968 = vmatprep.subr.mxu0 0.0
    %969 = vmatpush1.msra.mxu0 %v155
    %970 = vmatprep.subr.mxu0 0.0
    %971 = vmatpush1.msra.mxu0 %v156
    %972 = vmatprep.subr.mxu0 0.0
    %973 = vmatpush1.msra.mxu0 %v157
    %974 = vmatprep.subr.mxu0 0.0
    %975 = vmatpush1.msra.mxu0 %v158
    %976 = vmatprep.subr.mxu0 0.0
    %977 = vmatpush1.msra.mxu0 %v159
    %978 = vmatprep.subr.mxu0 0.0
    %979 = vmatpush1.msra.mxu0 %v160
    %980 = vmatprep.subr.mxu0 0.0
    %981 = vmatpush1.msra.mxu0 %v161
    %982 = vmatprep.subr.mxu0 0.0
    %983 = vmatpush1.msra.mxu0 %v162
    %984 = vmatprep.subr.mxu0 0.0
    %985 = vmatpush1.msra.mxu0 %v163
    %986 = vmatprep.subr.mxu0 0.0
    %987 = vmatpush1.msra.mxu0 %v164
    %988 = vmatprep.subr.mxu0 0.0
    %989 = vmatpush1.msra.mxu0 %v165
    %990 = vmatprep.subr.mxu0 0.0
    %991 = vmatpush1.msra.mxu0 %v166
    %992 = vmatprep.subr.mxu0 0.0
    %993 = vmatpush1.msra.mxu0 %v167
    %994 = vmatprep.subr.mxu0 0.0
    %995 = vmatpush1.msra.mxu0 %v168
    %996 = vmatprep.subr.mxu0 0.0
    %997 = vmatpush1.msra.mxu0 %v169
    %998 = vmatprep.subr.mxu0 0.0
    %999 = vmatpush1.msra.mxu0 %v170
    %1000 = vmatprep.subr.mxu0 0.0
    %1001 = vmatpush1.msra.mxu0 %v171
    %1002 = vmatprep.subr.mxu0 0.0
    %1003 = vmatpush1.msra.mxu0 %v172
    %1004 = vmatprep.subr.mxu0 0.0
    %1005 = vmatpush1.msra.mxu0 %v173
    %1006 = vmatprep.subr.mxu0 0.0
    %1007 = vmatpush1.msra.mxu0 %v174
    %1008 = vmatprep.subr.mxu0 0.0
    %1009 = vmatpush1.msra.mxu0 %v175
    %1010 = vmatprep.subr.mxu0 0.0
    %1011 = vmatpush1.msra.mxu0 %v176
    %1012 = vmatprep.subr.mxu0 0.0
    %1013 = vmatpush1.msra.mxu0 %v177
    %1014 = vmatprep.mubr.f32.mxu0 %v605
    %1015 = vmatmul.mubr.f32.gmra.mrb[0].mxu0 %v603
    %v1016 = vpop.f32.mrb[0].mxu0
    %v1017 = vadd.f32 %v947, %v1016
    %v1018 = vpop.f32.mrb[0].mxu0
    %1019 = vdwg.mxu0
    %1020 = vmatprep.subr.mxu0 0.0
    %1021 = vmatpush1.msra.mxu0 %v178
    %1022 = vmatprep.subr.mxu0 0.0
    %1023 = vmatpush1.msra.mxu0 %v179
    %1024 = vmatprep.subr.mxu0 0.0
    %1025 = vmatpush1.msra.mxu0 %v180
    %1026 = vmatprep.subr.mxu0 0.0
    %1027 = vmatpush1.msra.mxu0 %v181
    %1028 = vmatprep.subr.mxu0 0.0
    %1029 = vmatpush1.msra.mxu0 %v182
    %1030 = vmatprep.subr.mxu0 0.0
    %1031 = vmatpush1.msra.mxu0 %v183
    %1032 = vmatprep.subr.mxu0 0.0
    %1033 = vmatpush1.msra.mxu0 %v184
    %1034 = vmatprep.subr.mxu0 0.0
    %1035 = vmatpush1.msra.mxu0 %v185
    %1036 = vmatprep.subr.mxu0 0.0
    %1037 = vmatpush1.msra.mxu0 %v186
    %1038 = vmatprep.subr.mxu0 0.0
    %1039 = vmatpush1.msra.mxu0 %v187
    %1040 = vmatprep.subr.mxu0 0.0
    %1041 = vmatpush1.msra.mxu0 %v188
    %1042 = vmatprep.subr.mxu0 0.0
    %1043 = vmatpush1.msra.mxu0 %v189
    %1044 = vmatprep.subr.mxu0 0.0
    %1045 = vmatpush1.msra.mxu0 %v190
    %1046 = vmatprep.subr.mxu0 0.0
    %1047 = vmatpush1.msra.mxu0 %v191
    %1048 = vmatprep.subr.mxu0 0.0
    %1049 = vmatpush1.msra.mxu0 %v192
    %1050 = vmatprep.subr.mxu0 0.0
    %1051 = vmatpush1.msra.mxu0 %v193
    %1052 = vmatprep.subr.mxu0 0.0
    %1053 = vmatpush1.msra.mxu0 %v194
    %1054 = vmatprep.subr.mxu0 0.0
    %1055 = vmatpush1.msra.mxu0 %v195
    %1056 = vmatprep.subr.mxu0 0.0
    %1057 = vmatpush1.msra.mxu0 %v196
    %1058 = vmatprep.subr.mxu0 0.0
    %1059 = vmatpush1.msra.mxu0 %v197
    %1060 = vmatprep.subr.mxu0 0.0
    %1061 = vmatpush1.msra.mxu0 %v198
    %1062 = vmatprep.subr.mxu0 0.0
    %1063 = vmatpush1.msra.mxu0 %v199
    %1064 = vmatprep.subr.mxu0 0.0
    %1065 = vmatpush1.msra.mxu0 %v200
    %1066 = vmatprep.subr.mxu0 0.0
    %1067 = vmatpush1.msra.mxu0 %v201
    %1068 = vmatprep.subr.mxu0 0.0
    %1069 = vmatpush1.msra.mxu0 %v202
    %1070 = vmatprep.subr.mxu0 0.0
    %1071 = vmatpush1.msra.mxu0 %v203
    %1072 = vmatprep.subr.mxu0 0.0
    %1073 = vmatpush1.msra.mxu0 %v204
    %1074 = vmatprep.subr.mxu0 0.0
    %1075 = vmatpush1.msra.mxu0 %v205
    %1076 = vmatprep.subr.mxu0 0.0
    %1077 = vmatpush1.msra.mxu0 %v206
    %1078 = vmatprep.subr.mxu0 0.0
    %1079 = vmatpush1.msra.mxu0 %v207
    %1080 = vmatprep.subr.mxu0 0.0
    %1081 = vmatpush1.msra.mxu0 %v208
    %1082 = vmatprep.subr.mxu0 0.0
    %1083 = vmatpush1.msra.mxu0 %v209
    %1084 = vmatprep.mubr.f32.mxu0 %v621
    %1085 = vmatmul.mubr.f32.gmra.mrb[0].mxu0 %v613
    %v1086 = vpop.f32.mrb[0].mxu0
    %v1087 = vadd.f32 %v1017, %v1086
    %v1088 = vpop.f32.mrb[0].mxu0
    %1089 = vdwg.mxu0
    %1090 = vmatprep.subr.mxu0 0.0
    %1091 = vmatpush1.msra.mxu0 %v210
    %1092 = vmatprep.subr.mxu0 0.0
    %1093 = vmatpush1.msra.mxu0 %v211
    %1094 = vmatprep.subr.mxu0 0.0
    %1095 = vmatpush1.msra.mxu0 %v212
    %1096 = vmatprep.subr.mxu0 0.0
    %1097 = vmatpush1.msra.mxu0 %v213
    %1098 = vmatprep.subr.mxu0 0.0
    %1099 = vmatpush1.msra.mxu0 %v214
    %1100 = vmatprep.subr.mxu0 0.0
    %1101 = vmatpush1.msra.mxu0 %v215
    %1102 = vmatprep.subr.mxu0 0.0
    %1103 = vmatpush1.msra.mxu0 %v216
    %1104 = vmatprep.subr.mxu0 0.0
    %1105 = vmatpush1.msra.mxu0 %v217
    %1106 = vmatprep.subr.mxu0 0.0
    %1107 = vmatpush1.msra.mxu0 %v218
    %1108 = vmatprep.subr.mxu0 0.0
    %1109 = vmatpush1.msra.mxu0 %v219
    %1110 = vmatprep.subr.mxu0 0.0
    %1111 = vmatpush1.msra.mxu0 %v220
    %1112 = vmatprep.subr.mxu0 0.0
    %1113 = vmatpush1.msra.mxu0 %v221
    %1114 = vmatprep.subr.mxu0 0.0
    %1115 = vmatpush1.msra.mxu0 %v222
    %1116 = vmatprep.subr.mxu0 0.0
    %1117 = vmatpush1.msra.mxu0 %v223
    %1118 = vmatprep.subr.mxu0 0.0
    %1119 = vmatpush1.msra.mxu0 %v224
    %1120 = vmatprep.subr.mxu0 0.0
    %1121 = vmatpush1.msra.mxu0 %v225
    %1122 = vmatprep.subr.mxu0 0.0
    %1123 = vmatpush1.msra.mxu0 %v226
    %1124 = vmatprep.subr.mxu0 0.0
    %1125 = vmatpush1.msra.mxu0 %v227
    %1126 = vmatprep.subr.mxu0 0.0
    %1127 = vmatpush1.msra.mxu0 %v228
    %1128 = vmatprep.subr.mxu0 0.0
    %1129 = vmatpush1.msra.mxu0 %v229
    %1130 = vmatprep.subr.mxu0 0.0
    %1131 = vmatpush1.msra.mxu0 %v230
    %1132 = vmatprep.subr.mxu0 0.0
    %1133 = vmatpush1.msra.mxu0 %v231
    %1134 = vmatprep.subr.mxu0 0.0
    %1135 = vmatpush1.msra.mxu0 %v232
    %1136 = vmatprep.subr.mxu0 0.0
    %1137 = vmatpush1.msra.mxu0 %v233
    %1138 = vmatprep.subr.mxu0 0.0
    %1139 = vmatpush1.msra.mxu0 %v234
    %1140 = vmatprep.subr.mxu0 0.0
    %1141 = vmatpush1.msra.mxu0 %v235
    %1142 = vmatprep.subr.mxu0 0.0
    %1143 = vmatpush1.msra.mxu0 %v236
    %1144 = vmatprep.subr.mxu0 0.0
    %1145 = vmatpush1.msra.mxu0 %v237
    %1146 = vmatprep.subr.mxu0 0.0
    %1147 = vmatpush1.msra.mxu0 %v238
    %1148 = vmatprep.subr.mxu0 0.0
    %1149 = vmatpush1.msra.mxu0 %v239
    %1150 = vmatprep.subr.mxu0 0.0
    %1151 = vmatpush1.msra.mxu0 %v240
    %1152 = vmatprep.subr.mxu0 0.0
    %1153 = vmatpush1.msra.mxu0 %v241
    %1154 = vmatprep.mubr.f32.mxu0 %v622
    %1155 = vmatmul.mubr.f32.gmra.mrb[0].mxu0 %v620
    %v1156 = vpop.f32.mrb[0].mxu0
    %v1157 = vadd.f32 %v1087, %v1156
    %v1158 = vpop.f32.mrb[0].mxu0
    %1159 = vdwg.mxu0
    %1160 = vmatprep.subr.mxu0 0.0
    %1161 = vmatpush1.msra.mxu0 %v242
    %1162 = vmatprep.subr.mxu0 0.0
    %1163 = vmatpush1.msra.mxu0 %v243
    %1164 = vmatprep.subr.mxu0 0.0
    %1165 = vmatpush1.msra.mxu0 %v244
    %1166 = vmatprep.subr.mxu0 0.0
    %1167 = vmatpush1.msra.mxu0 %v245
    %1168 = vmatprep.subr.mxu0 0.0
    %1169 = vmatpush1.msra.mxu0 %v246
    %1170 = vmatprep.subr.mxu0 0.0
    %1171 = vmatpush1.msra.mxu0 %v247
    %1172 = vmatprep.subr.mxu0 0.0
    %1173 = vmatpush1.msra.mxu0 %v248
    %1174 = vmatprep.subr.mxu0 0.0
    %1175 = vmatpush1.msra.mxu0 %v249
    %1176 = vmatprep.subr.mxu0 0.0
    %1177 = vmatpush1.msra.mxu0 %v250
    %1178 = vmatprep.subr.mxu0 0.0
    %1179 = vmatpush1.msra.mxu0 %v251
    %1180 = vmatprep.subr.mxu0 0.0
    %1181 = vmatpush1.msra.mxu0 %v252
    %1182 = vmatprep.subr.mxu0 0.0
    %1183 = vmatpush1.msra.mxu0 %v253
    %1184 = vmatprep.subr.mxu0 0.0
    %1185 = vmatpush1.msra.mxu0 %v254
    %1186 = vmatprep.subr.mxu0 0.0
    %1187 = vmatpush1.msra.mxu0 %v255
    %1188 = vmatprep.subr.mxu0 0.0
    %1189 = vmatpush1.msra.mxu0 %v256
    %1190 = vmatprep.subr.mxu0 0.0
    %1191 = vmatpush1.msra.mxu0 %v257
    %1192 = vmatprep.subr.mxu0 0.0
    %1193 = vmatpush1.msra.mxu0 %v258
    %1194 = vmatprep.subr.mxu0 0.0
    %1195 = vmatpush1.msra.mxu0 %v259
    %1196 = vmatprep.subr.mxu0 0.0
    %1197 = vmatpush1.msra.mxu0 %v260
    %1198 = vmatprep.subr.mxu0 0.0
    %1199 = vmatpush1.msra.mxu0 %v261
    %1200 = vmatprep.subr.mxu0 0.0
    %1201 = vmatpush1.msra.mxu0 %v262
    %1202 = vmatprep.subr.mxu0 0.0
    %1203 = vmatpush1.msra.mxu0 %v263
    %1204 = vmatprep.subr.mxu0 0.0
    %1205 = vmatpush1.msra.mxu0 %v264
    %1206 = vmatprep.subr.mxu0 0.0
    %1207 = vmatpush1.msra.mxu0 %v265
    %1208 = vmatprep.subr.mxu0 0.0
    %1209 = vmatpush1.msra.mxu0 %v266
    %1210 = vmatprep.subr.mxu0 0.0
    %1211 = vmatpush1.msra.mxu0 %v267
    %1212 = vmatprep.subr.mxu0 0.0
    %1213 = vmatpush1.msra.mxu0 %v268
    %1214 = vmatprep.subr.mxu0 0.0
    %1215 = vmatpush1.msra.mxu0 %v269
    %1216 = vmatprep.subr.mxu0 0.0
    %1217 = vmatpush1.msra.mxu0 %v270
    %1218 = vmatprep.subr.mxu0 0.0
    %1219 = vmatpush1.msra.mxu0 %v271
    %1220 = vmatprep.subr.mxu0 0.0
    %1221 = vmatpush1.msra.mxu0 %v272
    %1222 = vmatprep.subr.mxu0 0.0
    %1223 = vmatpush1.msra.mxu0 %v273
    %1224 = vmatprep.mubr.f32.mxu0 %v638
    %1225 = vmatmul.mubr.f32.gmra.mrb[0].mxu0 %v630
    %v1226 = vpop.f32.mrb[0].mxu0
    %v1227 = vadd.f32 %v1157, %v1226
    %v1228 = vpop.f32.mrb[0].mxu0
    %1229 = vdwg.mxu0
    %1230 = vmatprep.subr.mxu0 0.0
    %1231 = vmatpush1.msra.mxu0 %v274
    %1232 = vmatprep.subr.mxu0 0.0
    %1233 = vmatpush1.msra.mxu0 %v275
    %1234 = vmatprep.subr.mxu0 0.0
    %1235 = vmatpush1.msra.mxu0 %v276
    %1236 = vmatprep.subr.mxu0 0.0
    %1237 = vmatpush1.msra.mxu0 %v277
    %1238 = vmatprep.subr.mxu0 0.0
    %1239 = vmatpush1.msra.mxu0 %v278
    %1240 = vmatprep.subr.mxu0 0.0
    %1241 = vmatpush1.msra.mxu0 %v279
    %1242 = vmatprep.subr.mxu0 0.0
    %1243 = vmatpush1.msra.mxu0 %v280
    %1244 = vmatprep.subr.mxu0 0.0
    %1245 = vmatpush1.msra.mxu0 %v281
    %1246 = vmatprep.subr.mxu0 0.0
    %1247 = vmatpush1.msra.mxu0 %v282
    %1248 = vmatprep.subr.mxu0 0.0
    %1249 = vmatpush1.msra.mxu0 %v283
    %1250 = vmatprep.subr.mxu0 0.0
    %1251 = vmatpush1.msra.mxu0 %v284
    %1252 = vmatprep.subr.mxu0 0.0
    %1253 = vmatpush1.msra.mxu0 %v285
    %1254 = vmatprep.subr.mxu0 0.0
    %1255 = vmatpush1.msra.mxu0 %v286
    %1256 = vmatprep.subr.mxu0 0.0
    %1257 = vmatpush1.msra.mxu0 %v287
    %1258 = vmatprep.subr.mxu0 0.0
    %1259 = vmatpush1.msra.mxu0 %v288
    %1260 = vmatprep.subr.mxu0 0.0
    %1261 = vmatpush1.msra.mxu0 %v289
    %1262 = vmatprep.subr.mxu0 0.0
    %1263 = vmatpush1.msra.mxu0 %v290
    %1264 = vmatprep.subr.mxu0 0.0
    %1265 = vmatpush1.msra.mxu0 %v291
    %1266 = vmatprep.subr.mxu0 0.0
    %1267 = vmatpush1.msra.mxu0 %v292
    %1268 = vmatprep.subr.mxu0 0.0
    %1269 = vmatpush1.msra.mxu0 %v293
    %1270 = vmatprep.subr.mxu0 0.0
    %1271 = vmatpush1.msra.mxu0 %v294
    %1272 = vmatprep.subr.mxu0 0.0
    %1273 = vmatpush1.msra.mxu0 %v295
    %1274 = vmatprep.subr.mxu0 0.0
    %1275 = vmatpush1.msra.mxu0 %v296
    %1276 = vmatprep.subr.mxu0 0.0
    %1277 = vmatpush1.msra.mxu0 %v297
    %1278 = vmatprep.subr.mxu0 0.0
    %1279 = vmatpush1.msra.mxu0 %v298
    %1280 = vmatprep.subr.mxu0 0.0
    %1281 = vmatpush1.msra.mxu0 %v299
    %1282 = vmatprep.subr.mxu0 0.0
    %1283 = vmatpush1.msra.mxu0 %v300
    %1284 = vmatprep.subr.mxu0 0.0
    %1285 = vmatpush1.msra.mxu0 %v301
    %1286 = vmatprep.subr.mxu0 0.0
    %1287 = vmatpush1.msra.mxu0 %v302
    %1288 = vmatprep.subr.mxu0 0.0
    %1289 = vmatpush1.msra.mxu0 %v303
    %1290 = vmatprep.subr.mxu0 0.0
    %1291 = vmatpush1.msra.mxu0 %v304
    %1292 = vmatprep.subr.mxu0 0.0
    %1293 = vmatpush1.msra.mxu0 %v305
    %1294 = vmatprep.mubr.f32.mxu0 %v639
    %1295 = vmatmul.mubr.f32.gmra.mrb[0].mxu0 %v637
    %v1296 = vpop.f32.mrb[0].mxu0
    %v1297 = vadd.f32 %v1227, %v1296
    %v1298 = vpop.f32.mrb[0].mxu0
    %1299 = vdwg.mxu0
    %1300 = vmatprep.subr.mxu0 0.0
    %1301 = vmatpush1.msra.mxu0 %v306
    %1302 = vmatprep.subr.mxu0 0.0
    %1303 = vmatpush1.msra.mxu0 %v307
    %1304 = vmatprep.subr.mxu0 0.0
    %1305 = vmatpush1.msra.mxu0 %v308
    %1306 = vmatprep.subr.mxu0 0.0
    %1307 = vmatpush1.msra.mxu0 %v309
    %1308 = vmatprep.subr.mxu0 0.0
    %1309 = vmatpush1.msra.mxu0 %v310
    %1310 = vmatprep.subr.mxu0 0.0
    %1311 = vmatpush1.msra.mxu0 %v311
    %1312 = vmatprep.subr.mxu0 0.0
    %1313 = vmatpush1.msra.mxu0 %v312
    %1314 = vmatprep.subr.mxu0 0.0
    %1315 = vmatpush1.msra.mxu0 %v313
    %1316 = vmatprep.subr.mxu0 0.0
    %1317 = vmatpush1.msra.mxu0 %v314
    %1318 = vmatprep.subr.mxu0 0.0
    %1319 = vmatpush1.msra.mxu0 %v315
    %1320 = vmatprep.subr.mxu0 0.0
    %1321 = vmatpush1.msra.mxu0 %v316
    %1322 = vmatprep.subr.mxu0 0.0
    %1323 = vmatpush1.msra.mxu0 %v317
    %1324 = vmatprep.subr.mxu0 0.0
    %1325 = vmatpush1.msra.mxu0 %v318
    %1326 = vmatprep.subr.mxu0 0.0
    %1327 = vmatpush1.msra.mxu0 %v319
    %1328 = vmatprep.subr.mxu0 0.0
    %1329 = vmatpush1.msra.mxu0 %v320
    %1330 = vmatprep.subr.mxu0 0.0
    %1331 = vmatpush1.msra.mxu0 %v321
    %1332 = vmatprep.subr.mxu0 0.0
    %1333 = vmatpush1.msra.mxu0 %v322
    %1334 = vmatprep.subr.mxu0 0.0
    %1335 = vmatpush1.msra.mxu0 %v323
    %1336 = vmatprep.subr.mxu0 0.0
    %1337 = vmatpush1.msra.mxu0 %v324
    %1338 = vmatprep.subr.mxu0 0.0
    %1339 = vmatpush1.msra.mxu0 %v325
    %1340 = vmatprep.subr.mxu0 0.0
    %1341 = vmatpush1.msra.mxu0 %v326
    %1342 = vmatprep.subr.mxu0 0.0
    %1343 = vmatpush1.msra.mxu0 %v327
    %1344 = vmatprep.subr.mxu0 0.0
    %1345 = vmatpush1.msra.mxu0 %v328
    %1346 = vmatprep.subr.mxu0 0.0
    %1347 = vmatpush1.msra.mxu0 %v329
    %1348 = vmatprep.subr.mxu0 0.0
    %1349 = vmatpush1.msra.mxu0 %v330
    %1350 = vmatprep.subr.mxu0 0.0
    %1351 = vmatpush1.msra.mxu0 %v331
    %1352 = vmatprep.subr.mxu0 0.0
    %1353 = vmatpush1.msra.mxu0 %v332
    %1354 = vmatprep.subr.mxu0 0.0
    %1355 = vmatpush1.msra.mxu0 %v333
    %1356 = vmatprep.subr.mxu0 0.0
    %1357 = vmatpush1.msra.mxu0 %v334
    %1358 = vmatprep.subr.mxu0 0.0
    %1359 = vmatpush1.msra.mxu0 %v335
    %1360 = vmatprep.subr.mxu0 0.0
    %1361 = vmatpush1.msra.mxu0 %v336
    %1362 = vmatprep.subr.mxu0 0.0
    %1363 = vmatpush1.msra.mxu0 %v337
    %1364 = vmatprep.mubr.f32.mxu0 %v655
    %1365 = vmatmul.mubr.f32.gmra.mrb[0].mxu0 %v647
    %v1366 = vpop.f32.mrb[0].mxu0
    %v1367 = vadd.f32 %v1297, %v1366
    %v1368 = vpop.f32.mrb[0].mxu0
    %1369 = vdwg.mxu0
    %1370 = vmatprep.subr.mxu0 0.0
    %1371 = vmatpush1.msra.mxu0 %v338
    %1372 = vmatprep.subr.mxu0 0.0
    %1373 = vmatpush1.msra.mxu0 %v339
    %1374 = vmatprep.subr.mxu0 0.0
    %1375 = vmatpush1.msra.mxu0 %v340
    %1376 = vmatprep.subr.mxu0 0.0
    %1377 = vmatpush1.msra.mxu0 %v341
    %1378 = vmatprep.subr.mxu0 0.0
    %1379 = vmatpush1.msra.mxu0 %v342
    %1380 = vmatprep.subr.mxu0 0.0
    %1381 = vmatpush1.msra.mxu0 %v343
    %1382 = vmatprep.subr.mxu0 0.0
    %1383 = vmatpush1.msra.mxu0 %v344
    %1384 = vmatprep.subr.mxu0 0.0
    %1385 = vmatpush1.msra.mxu0 %v345
    %1386 = vmatprep.subr.mxu0 0.0
    %1387 = vmatpush1.msra.mxu0 %v346
    %1388 = vmatprep.subr.mxu0 0.0
    %1389 = vmatpush1.msra.mxu0 %v347
    %1390 = vmatprep.subr.mxu0 0.0
    %1391 = vmatpush1.msra.mxu0 %v348
    %1392 = vmatprep.subr.mxu0 0.0
    %1393 = vmatpush1.msra.mxu0 %v349
    %1394 = vmatprep.subr.mxu0 0.0
    %1395 = vmatpush1.msra.mxu0 %v350
    %1396 = vmatprep.subr.mxu0 0.0
    %1397 = vmatpush1.msra.mxu0 %v351
    %1398 = vmatprep.subr.mxu0 0.0
    %1399 = vmatpush1.msra.mxu0 %v352
    %1400 = vmatprep.subr.mxu0 0.0
    %1401 = vmatpush1.msra.mxu0 %v353
    %1402 = vmatprep.subr.mxu0 0.0
    %1403 = vmatpush1.msra.mxu0 %v354
    %1404 = vmatprep.subr.mxu0 0.0
    %1405 = vmatpush1.msra.mxu0 %v355
    %1406 = vmatprep.subr.mxu0 0.0
    %1407 = vmatpush1.msra.mxu0 %v356
    %1408 = vmatprep.subr.mxu0 0.0
    %1409 = vmatpush1.msra.mxu0 %v357
    %1410 = vmatprep.subr.mxu0 0.0
    %1411 = vmatpush1.msra.mxu0 %v358
    %1412 = vmatprep.subr.mxu0 0.0
    %1413 = vmatpush1.msra.mxu0 %v359
    %1414 = vmatprep.subr.mxu0 0.0
    %1415 = vmatpush1.msra.mxu0 %v360
    %1416 = vmatprep.subr.mxu0 0.0
    %1417 = vmatpush1.msra.mxu0 %v361
    %1418 = vmatprep.subr.mxu0 0.0
    %1419 = vmatpush1.msra.mxu0 %v362
    %1420 = vmatprep.subr.mxu0 0.0
    %1421 = vmatpush1.msra.mxu0 %v363
    %1422 = vmatprep.subr.mxu0 0.0
    %1423 = vmatpush1.msra.mxu0 %v364
    %1424 = vmatprep.subr.mxu0 0.0
    %1425 = vmatpush1.msra.mxu0 %v365
    %1426 = vmatprep.subr.mxu0 0.0
    %1427 = vmatpush1.msra.mxu0 %v366
    %1428 = vmatprep.subr.mxu0 0.0
    %1429 = vmatpush1.msra.mxu0 %v367
    %1430 = vmatprep.subr.mxu0 0.0
    %1431 = vmatpush1.msra.mxu0 %v368
    %1432 = vmatprep.subr.mxu0 0.0
    %1433 = vmatpush1.msra.mxu0 %v369
    %1434 = vmatprep.mubr.f32.mxu0 %v656
    %1435 = vmatmul.mubr.f32.gmra.mrb[0].mxu0 %v654
    %v1436 = vpop.f32.mrb[0].mxu0
    %v1437 = vadd.f32 %v1367, %v1436
    %v1438 = vpop.f32.mrb[0].mxu0
    %1439 = vdwg.mxu0
    %1440 = vmatprep.subr.mxu0 0.0
    %1441 = vmatpush1.msra.mxu0 %v370
    %1442 = vmatprep.subr.mxu0 0.0
    %1443 = vmatpush1.msra.mxu0 %v371
    %1444 = vmatprep.subr.mxu0 0.0
    %1445 = vmatpush1.msra.mxu0 %v372
    %1446 = vmatprep.subr.mxu0 0.0
    %1447 = vmatpush1.msra.mxu0 %v373
    %1448 = vmatprep.subr.mxu0 0.0
    %1449 = vmatpush1.msra.mxu0 %v374
    %1450 = vmatprep.subr.mxu0 0.0
    %1451 = vmatpush1.msra.mxu0 %v375
    %1452 = vmatprep.subr.mxu0 0.0
    %1453 = vmatpush1.msra.mxu0 %v376
    %1454 = vmatprep.subr.mxu0 0.0
    %1455 = vmatpush1.msra.mxu0 %v377
    %1456 = vmatprep.subr.mxu0 0.0
    %1457 = vmatpush1.msra.mxu0 %v378
    %1458 = vmatprep.subr.mxu0 0.0
    %1459 = vmatpush1.msra.mxu0 %v379
    %1460 = vmatprep.subr.mxu0 0.0
    %1461 = vmatpush1.msra.mxu0 %v380
    %1462 = vmatprep.subr.mxu0 0.0
    %1463 = vmatpush1.msra.mxu0 %v381
    %1464 = vmatprep.subr.mxu0 0.0
    %1465 = vmatpush1.msra.mxu0 %v382
    %1466 = vmatprep.subr.mxu0 0.0
    %1467 = vmatpush1.msra.mxu0 %v383
    %1468 = vmatprep.subr.mxu0 0.0
    %1469 = vmatpush1.msra.mxu0 %v384
    %1470 = vmatprep.subr.mxu0 0.0
    %1471 = vmatpush1.msra.mxu0 %v385
    %1472 = vmatprep.subr.mxu0 0.0
    %1473 = vmatpush1.msra.mxu0 %v386
    %1474 = vmatprep.subr.mxu0 0.0
    %1475 = vmatpush1.msra.mxu0 %v387
    %1476 = vmatprep.subr.mxu0 0.0
    %1477 = vmatpush1.msra.mxu0 %v388
    %1478 = vmatprep.subr.mxu0 0.0
    %1479 = vmatpush1.msra.mxu0 %v389
    %1480 = vmatprep.subr.mxu0 0.0
    %1481 = vmatpush1.msra.mxu0 %v390
    %1482 = vmatprep.subr.mxu0 0.0
    %1483 = vmatpush1.msra.mxu0 %v391
    %1484 = vmatprep.subr.mxu0 0.0
    %1485 = vmatpush1.msra.mxu0 %v392
    %1486 = vmatprep.subr.mxu0 0.0
    %1487 = vmatpush1.msra.mxu0 %v393
    %1488 = vmatprep.subr.mxu0 0.0
    %1489 = vmatpush1.msra.mxu0 %v394
    %1490 = vmatprep.subr.mxu0 0.0
    %1491 = vmatpush1.msra.mxu0 %v395
    %1492 = vmatprep.subr.mxu0 0.0
    %1493 = vmatpush1.msra.mxu0 %v396
    %1494 = vmatprep.subr.mxu0 0.0
    %1495 = vmatpush1.msra.mxu0 %v397
    %1496 = vmatprep.subr.mxu0 0.0
    %1497 = vmatpush1.msra.mxu0 %v398
    %1498 = vmatprep.subr.mxu0 0.0
    %1499 = vmatpush1.msra.mxu0 %v399
    %1500 = vmatprep.subr.mxu0 0.0
    %1501 = vmatpush1.msra.mxu0 %v400
    %1502 = vmatprep.subr.mxu0 0.0
    %1503 = vmatpush1.msra.mxu0 %v401
    %1504 = vmatprep.mubr.f32.mxu0 %v672
    %1505 = vmatmul.mubr.f32.gmra.mrb[0].mxu0 %v664
    %v1506 = vpop.f32.mrb[0].mxu0
    %v1507 = vadd.f32 %v1437, %v1506
    %v1508 = vpop.f32.mrb[0].mxu0
    %1509 = vdwg.mxu0
    %1510 = vmatprep.subr.mxu0 0.0
    %1511 = vmatpush1.msra.mxu0 %v402
    %1512 = vmatprep.subr.mxu0 0.0
    %1513 = vmatpush1.msra.mxu0 %v403
    %1514 = vmatprep.subr.mxu0 0.0
    %1515 = vmatpush1.msra.mxu0 %v404
    %1516 = vmatprep.subr.mxu0 0.0
    %1517 = vmatpush1.msra.mxu0 %v405
    %1518 = vmatprep.subr.mxu0 0.0
    %1519 = vmatpush1.msra.mxu0 %v406
    %1520 = vmatprep.subr.mxu0 0.0
    %1521 = vmatpush1.msra.mxu0 %v407
    %1522 = vmatprep.subr.mxu0 0.0
    %1523 = vmatpush1.msra.mxu0 %v408
    %1524 = vmatprep.subr.mxu0 0.0
    %1525 = vmatpush1.msra.mxu0 %v409
    %1526 = vmatprep.subr.mxu0 0.0
    %1527 = vmatpush1.msra.mxu0 %v410
    %1528 = vmatprep.subr.mxu0 0.0
    %1529 = vmatpush1.msra.mxu0 %v411
    %1530 = vmatprep.subr.mxu0 0.0
    %1531 = vmatpush1.msra.mxu0 %v412
    %1532 = vmatprep.subr.mxu0 0.0
    %1533 = vmatpush1.msra.mxu0 %v413
    %1534 = vmatprep.subr.mxu0 0.0
    %1535 = vmatpush1.msra.mxu0 %v414
    %1536 = vmatprep.subr.mxu0 0.0
    %1537 = vmatpush1.msra.mxu0 %v415
    %1538 = vmatprep.subr.mxu0 0.0
    %1539 = vmatpush1.msra.mxu0 %v416
    %1540 = vmatprep.subr.mxu0 0.0
    %1541 = vmatpush1.msra.mxu0 %v417
    %1542 = vmatprep.subr.mxu0 0.0
    %1543 = vmatpush1.msra.mxu0 %v418
    %1544 = vmatprep.subr.mxu0 0.0
    %1545 = vmatpush1.msra.mxu0 %v419
    %1546 = vmatprep.subr.mxu0 0.0
    %1547 = vmatpush1.msra.mxu0 %v420
    %1548 = vmatprep.subr.mxu0 0.0
    %1549 = vmatpush1.msra.mxu0 %v421
    %1550 = vmatprep.subr.mxu0 0.0
    %1551 = vmatpush1.msra.mxu0 %v422
    %1552 = vmatprep.subr.mxu0 0.0
    %1553 = vmatpush1.msra.mxu0 %v423
    %1554 = vmatprep.subr.mxu0 0.0
    %1555 = vmatpush1.msra.mxu0 %v424
    %1556 = vmatprep.subr.mxu0 0.0
    %1557 = vmatpush1.msra.mxu0 %v425
    %1558 = vmatprep.subr.mxu0 0.0
    %1559 = vmatpush1.msra.mxu0 %v426
    %1560 = vmatprep.subr.mxu0 0.0
    %1561 = vmatpush1.msra.mxu0 %v427
    %1562 = vmatprep.subr.mxu0 0.0
    %1563 = vmatpush1.msra.mxu0 %v428
    %1564 = vmatprep.subr.mxu0 0.0
    %1565 = vmatpush1.msra.mxu0 %v429
    %1566 = vmatprep.subr.mxu0 0.0
    %1567 = vmatpush1.msra.mxu0 %v430
    %1568 = vmatprep.subr.mxu0 0.0
    %1569 = vmatpush1.msra.mxu0 %v431
    %1570 = vmatprep.subr.mxu0 0.0
    %1571 = vmatpush1.msra.mxu0 %v432
    %1572 = vmatprep.subr.mxu0 0.0
    %1573 = vmatpush1.msra.mxu0 %v433
    %1574 = vmatprep.mubr.f32.mxu0 %v673
    %1575 = vmatmul.mubr.f32.gmra.mrb[0].mxu0 %v671
    %v1576 = vpop.f32.mrb[0].mxu0
    %v1577 = vadd.f32 %v1507, %v1576
    %v1578 = vpop.f32.mrb[0].mxu0
    %1579 = vdwg.mxu0
    %1580 = vmatprep.subr.mxu0 0.0
    %1581 = vmatpush1.msra.mxu0 %v434
    %1582 = vmatprep.subr.mxu0 0.0
    %1583 = vmatpush1.msra.mxu0 %v435
    %1584 = vmatprep.subr.mxu0 0.0
    %1585 = vmatpush1.msra.mxu0 %v436
    %1586 = vmatprep.subr.mxu0 0.0
    %1587 = vmatpush1.msra.mxu0 %v437
    %1588 = vmatprep.subr.mxu0 0.0
    %1589 = vmatpush1.msra.mxu0 %v438
    %1590 = vmatprep.subr.mxu0 0.0
    %1591 = vmatpush1.msra.mxu0 %v439
    %1592 = vmatprep.subr.mxu0 0.0
    %1593 = vmatpush1.msra.mxu0 %v440
    %1594 = vmatprep.subr.mxu0 0.0
    %1595 = vmatpush1.msra.mxu0 %v441
    %1596 = vmatprep.subr.mxu0 0.0
    %1597 = vmatpush1.msra.mxu0 %v442
    %1598 = vmatprep.subr.mxu0 0.0
    %1599 = vmatpush1.msra.mxu0 %v443
    %1600 = vmatprep.subr.mxu0 0.0
    %1601 = vmatpush1.msra.mxu0 %v444
    %1602 = vmatprep.subr.mxu0 0.0
    %1603 = vmatpush1.msra.mxu0 %v445
    %1604 = vmatprep.subr.mxu0 0.0
    %1605 = vmatpush1.msra.mxu0 %v446
    %1606 = vmatprep.subr.mxu0 0.0
    %1607 = vmatpush1.msra.mxu0 %v447
    %1608 = vmatprep.subr.mxu0 0.0
    %1609 = vmatpush1.msra.mxu0 %v448
    %1610 = vmatprep.subr.mxu0 0.0
    %1611 = vmatpush1.msra.mxu0 %v449
    %1612 = vmatprep.subr.mxu0 0.0
    %1613 = vmatpush1.msra.mxu0 %v450
    %1614 = vmatprep.subr.mxu0 0.0
    %1615 = vmatpush1.msra.mxu0 %v451
    %1616 = vmatprep.subr.mxu0 0.0
    %1617 = vmatpush1.msra.mxu0 %v452
    %1618 = vmatprep.subr.mxu0 0.0
    %1619 = vmatpush1.msra.mxu0 %v453
    %1620 = vmatprep.subr.mxu0 0.0
    %1621 = vmatpush1.msra.mxu0 %v454
    %1622 = vmatprep.subr.mxu0 0.0
    %1623 = vmatpush1.msra.mxu0 %v455
    %1624 = vmatprep.subr.mxu0 0.0
    %1625 = vmatpush1.msra.mxu0 %v456
    %1626 = vmatprep.subr.mxu0 0.0
    %1627 = vmatpush1.msra.mxu0 %v457
    %1628 = vmatprep.subr.mxu0 0.0
    %1629 = vmatpush1.msra.mxu0 %v458
    %1630 = vmatprep.subr.mxu0 0.0
    %1631 = vmatpush1.msra.mxu0 %v459
    %1632 = vmatprep.subr.mxu0 0.0
    %1633 = vmatpush1.msra.mxu0 %v460
    %1634 = vmatprep.subr.mxu0 0.0
    %1635 = vmatpush1.msra.mxu0 %v461
    %1636 = vmatprep.subr.mxu0 0.0
    %1637 = vmatpush1.msra.mxu0 %v462
    %1638 = vmatprep.subr.mxu0 0.0
    %1639 = vmatpush1.msra.mxu0 %v463
    %1640 = vmatprep.subr.mxu0 0.0
    %1641 = vmatpush1.msra.mxu0 %v464
    %1642 = vmatprep.subr.mxu0 0.0
    %1643 = vmatpush1.msra.mxu0 %v465
    %1644 = vmatprep.mubr.f32.mxu0 %v689
    %1645 = vmatmul.mubr.f32.gmra.mrb[0].mxu0 %v681
    %v1646 = vpop.f32.mrb[0].mxu0
    %v1647 = vadd.f32 %v1577, %v1646
    %v1648 = vpop.f32.mrb[0].mxu0
    %1649 = vdwg.mxu0
    %1650 = vmatprep.subr.mxu0 0.0
    %1651 = vmatpush1.msra.mxu0 %v466
    %1652 = vmatprep.subr.mxu0 0.0
    %1653 = vmatpush1.msra.mxu0 %v467
    %1654 = vmatprep.subr.mxu0 0.0
    %1655 = vmatpush1.msra.mxu0 %v468
    %1656 = vmatprep.subr.mxu0 0.0
    %1657 = vmatpush1.msra.mxu0 %v469
    %1658 = vmatprep.subr.mxu0 0.0
    %1659 = vmatpush1.msra.mxu0 %v470
    %1660 = vmatprep.subr.mxu0 0.0
    %1661 = vmatpush1.msra.mxu0 %v471
    %1662 = vmatprep.subr.mxu0 0.0
    %1663 = vmatpush1.msra.mxu0 %v472
    %1664 = vmatprep.subr.mxu0 0.0
    %1665 = vmatpush1.msra.mxu0 %v473
    %1666 = vmatprep.subr.mxu0 0.0
    %1667 = vmatpush1.msra.mxu0 %v474
    %1668 = vmatprep.subr.mxu0 0.0
    %1669 = vmatpush1.msra.mxu0 %v475
    %1670 = vmatprep.subr.mxu0 0.0
    %1671 = vmatpush1.msra.mxu0 %v476
    %1672 = vmatprep.subr.mxu0 0.0
    %1673 = vmatpush1.msra.mxu0 %v477
    %1674 = vmatprep.subr.mxu0 0.0
    %1675 = vmatpush1.msra.mxu0 %v478
    %1676 = vmatprep.subr.mxu0 0.0
    %1677 = vmatpush1.msra.mxu0 %v479
    %1678 = vmatprep.subr.mxu0 0.0
    %1679 = vmatpush1.msra.mxu0 %v480
    %1680 = vmatprep.subr.mxu0 0.0
    %1681 = vmatpush1.msra.mxu0 %v481
    %1682 = vmatprep.subr.mxu0 0.0
    %1683 = vmatpush1.msra.mxu0 %v482
    %1684 = vmatprep.subr.mxu0 0.0
    %1685 = vmatpush1.msra.mxu0 %v483
    %1686 = vmatprep.subr.mxu0 0.0
    %1687 = vmatpush1.msra.mxu0 %v484
    %1688 = vmatprep.subr.mxu0 0.0
    %1689 = vmatpush1.msra.mxu0 %v485
    %1690 = vmatprep.subr.mxu0 0.0
    %1691 = vmatpush1.msra.mxu0 %v486
    %1692 = vmatprep.subr.mxu0 0.0
    %1693 = vmatpush1.msra.mxu0 %v487
    %1694 = vmatprep.subr.mxu0 0.0
    %1695 = vmatpush1.msra.mxu0 %v488
    %1696 = vmatprep.subr.mxu0 0.0
    %1697 = vmatpush1.msra.mxu0 %v489
    %1698 = vmatprep.subr.mxu0 0.0
    %1699 = vmatpush1.msra.mxu0 %v490
    %1700 = vmatprep.subr.mxu0 0.0
    %1701 = vmatpush1.msra.mxu0 %v491
    %1702 = vmatprep.subr.mxu0 0.0
    %1703 = vmatpush1.msra.mxu0 %v492
    %1704 = vmatprep.subr.mxu0 0.0
    %1705 = vmatpush1.msra.mxu0 %v493
    %1706 = vmatprep.subr.mxu0 0.0
    %1707 = vmatpush1.msra.mxu0 %v494
    %1708 = vmatprep.subr.mxu0 0.0
    %1709 = vmatpush1.msra.mxu0 %v495
    %1710 = vmatprep.subr.mxu0 0.0
    %1711 = vmatpush1.msra.mxu0 %v496
    %1712 = vmatprep.subr.mxu0 0.0
    %1713 = vmatpush1.msra.mxu0 %v497
    %1714 = vmatprep.mubr.f32.mxu0 %v690
    %1715 = vmatmul.mubr.f32.gmra.mrb[0].mxu0 %v688
    %v1716 = vpop.f32.mrb[0].mxu0
    %v1717 = vadd.f32 %v1647, %v1716
    %v1718 = vpop.f32.mrb[0].mxu0
    %1719 = vdwg.mxu0
    %1720 = vmatprep.subr.mxu0 0.0
    %1721 = vmatpush1.msra.mxu0 %v498
    %1722 = vmatprep.subr.mxu0 0.0
    %1723 = vmatpush1.msra.mxu0 %v499
    %1724 = vmatprep.subr.mxu0 0.0
    %1725 = vmatpush1.msra.mxu0 %v500
    %1726 = vmatprep.subr.mxu0 0.0
    %1727 = vmatpush1.msra.mxu0 %v501
    %1728 = vmatprep.subr.mxu0 0.0
    %1729 = vmatpush1.msra.mxu0 %v502
    %1730 = vmatprep.subr.mxu0 0.0
    %1731 = vmatpush1.msra.mxu0 %v503
    %1732 = vmatprep.subr.mxu0 0.0
    %1733 = vmatpush1.msra.mxu0 %v504
    %1734 = vmatprep.subr.mxu0 0.0
    %1735 = vmatpush1.msra.mxu0 %v505
    %1736 = vmatprep.subr.mxu0 0.0
    %1737 = vmatpush1.msra.mxu0 %v506
    %1738 = vmatprep.subr.mxu0 0.0
    %1739 = vmatpush1.msra.mxu0 %v507
    %1740 = vmatprep.subr.mxu0 0.0
    %1741 = vmatpush1.msra.mxu0 %v508
    %1742 = vmatprep.subr.mxu0 0.0
    %1743 = vmatpush1.msra.mxu0 %v509
    %1744 = vmatprep.subr.mxu0 0.0
    %1745 = vmatpush1.msra.mxu0 %v510
    %1746 = vmatprep.subr.mxu0 0.0
    %1747 = vmatpush1.msra.mxu0 %v511
    %1748 = vmatprep.subr.mxu0 0.0
    %1749 = vmatpush1.msra.mxu0 %v512
    %1750 = vmatprep.subr.mxu0 0.0
    %1751 = vmatpush1.msra.mxu0 %v513
    %1752 = vmatprep.subr.mxu0 0.0
    %1753 = vmatpush1.msra.mxu0 %v514
    %1754 = vmatprep.subr.mxu0 0.0
    %1755 = vmatpush1.msra.mxu0 %v515
    %1756 = vmatprep.subr.mxu0 0.0
    %1757 = vmatpush1.msra.mxu0 %v516
    %1758 = vmatprep.subr.mxu0 0.0
    %1759 = vmatpush1.msra.mxu0 %v517
    %1760 = vmatprep.subr.mxu0 0.0
    %1761 = vmatpush1.msra.mxu0 %v518
    %1762 = vmatprep.subr.mxu0 0.0
    %1763 = vmatpush1.msra.mxu0 %v519
    %1764 = vmatprep.subr.mxu0 0.0
    %1765 = vmatpush1.msra.mxu0 %v520
    %1766 = vmatprep.subr.mxu0 0.0
    %1767 = vmatpush1.msra.mxu0 %v521
    %1768 = vmatprep.subr.mxu0 0.0
    %1769 = vmatpush1.msra.mxu0 %v522
    %1770 = vmatprep.subr.mxu0 0.0
    %1771 = vmatpush1.msra.mxu0 %v523
    %1772 = vmatprep.subr.mxu0 0.0
    %1773 = vmatpush1.msra.mxu0 %v524
    %1774 = vmatprep.subr.mxu0 0.0
    %1775 = vmatpush1.msra.mxu0 %v525
    %1776 = vmatprep.subr.mxu0 0.0
    %1777 = vmatpush1.msra.mxu0 %v526
    %1778 = vmatprep.subr.mxu0 0.0
    %1779 = vmatpush1.msra.mxu0 %v527
    %1780 = vmatprep.subr.mxu0 0.0
    %1781 = vmatpush1.msra.mxu0 %v528
    %1782 = vmatprep.subr.mxu0 0.0
    %1783 = vmatpush1.msra.mxu0 %v529
    %1784 = vmatprep.mubr.f32.mxu0 %v706
    %1785 = vmatmul.mubr.f32.gmra.mrb[0].mxu0 %v698
    %v1786 = vpop.f32.mrb[0].mxu0
    %v1787 = vadd.f32 %v1717, %v1786
    %v1788 = vpop.f32.mrb[0].mxu0
    %1789 = vdwg.mxu0
    %1790 = vmatprep.subr.mxu0 0.0
    %1791 = vmatpush1.msra.mxu0 %v530
    %1792 = vmatprep.subr.mxu0 0.0
    %1793 = vmatpush1.msra.mxu0 %v531
    %1794 = vmatprep.subr.mxu0 0.0
    %1795 = vmatpush1.msra.mxu0 %v532
    %1796 = vmatprep.subr.mxu0 0.0
    %1797 = vmatpush1.msra.mxu0 %v533
    %1798 = vmatprep.subr.mxu0 0.0
    %1799 = vmatpush1.msra.mxu0 %v534
    %1800 = vmatprep.subr.mxu0 0.0
    %1801 = vmatpush1.msra.mxu0 %v535
    %1802 = vmatprep.subr.mxu0 0.0
    %1803 = vmatpush1.msra.mxu0 %v536
    %1804 = vmatprep.subr.mxu0 0.0
    %1805 = vmatpush1.msra.mxu0 %v537
    %1806 = vmatprep.subr.mxu0 0.0
    %1807 = vmatpush1.msra.mxu0 %v538
    %1808 = vmatprep.subr.mxu0 0.0
    %1809 = vmatpush1.msra.mxu0 %v539
    %1810 = vmatprep.subr.mxu0 0.0
    %1811 = vmatpush1.msra.mxu0 %v540
    %1812 = vmatprep.subr.mxu0 0.0
    %1813 = vmatpush1.msra.mxu0 %v541
    %1814 = vmatprep.subr.mxu0 0.0
    %1815 = vmatpush1.msra.mxu0 %v542
    %1816 = vmatprep.subr.mxu0 0.0
    %1817 = vmatpush1.msra.mxu0 %v543
    %1818 = vmatprep.subr.mxu0 0.0
    %1819 = vmatpush1.msra.mxu0 %v544
    %1820 = vmatprep.subr.mxu0 0.0
    %1821 = vmatpush1.msra.mxu0 %v545
    %1822 = vmatprep.subr.mxu0 0.0
    %1823 = vmatpush1.msra.mxu0 %v546
    %1824 = vmatprep.subr.mxu0 0.0
    %1825 = vmatpush1.msra.mxu0 %v547
    %1826 = vmatprep.subr.mxu0 0.0
    %1827 = vmatpush1.msra.mxu0 %v548
    %1828 = vmatprep.subr.mxu0 0.0
    %1829 = vmatpush1.msra.mxu0 %v549
    %1830 = vmatprep.subr.mxu0 0.0
    %1831 = vmatpush1.msra.mxu0 %v550
    %1832 = vmatprep.subr.mxu0 0.0
    %1833 = vmatpush1.msra.mxu0 %v551
    %1834 = vmatprep.subr.mxu0 0.0
    %1835 = vmatpush1.msra.mxu0 %v552
    %1836 = vmatprep.subr.mxu0 0.0
    %1837 = vmatpush1.msra.mxu0 %v553
    %1838 = vmatprep.subr.mxu0 0.0
    %1839 = vmatpush1.msra.mxu0 %v554
    %1840 = vmatprep.subr.mxu0 0.0
    %1841 = vmatpush1.msra.mxu0 %v555
    %1842 = vmatprep.subr.mxu0 0.0
    %1843 = vmatpush1.msra.mxu0 %v556
    %1844 = vmatprep.subr.mxu0 0.0
    %1845 = vmatpush1.msra.mxu0 %v557
    %1846 = vmatprep.subr.mxu0 0.0
    %1847 = vmatpush1.msra.mxu0 %v558
    %1848 = vmatprep.subr.mxu0 0.0
    %1849 = vmatpush1.msra.mxu0 %v559
    %1850 = vmatprep.subr.mxu0 0.0
    %1851 = vmatpush1.msra.mxu0 %v560
    %1852 = vmatprep.subr.mxu0 0.0
    %1853 = vmatpush1.msra.mxu0 %v561
    %1854 = vmatprep.mubr.f32.mxu0 %v707
    %1855 = vmatmul.mubr.f32.gmra.mrb[0].mxu0 %v705
    %v1856 = vpop.f32.mrb[0].mxu0
    %v1857 = vadd.f32 %v1787, %v1856
    %v1858 = vpop.f32.mrb[0].mxu0
    %1859 = vdwg.mxu0
    %v1860 = vxor.u32 %v1857, 2147483648
    %v1861 = vmul.f32 %v1860, 1.442695
    %v1862 = vpow.pop %v1861
    %v1863 = vadd.f32 %v1862, 1.0
    %v1864 = vrcp.pop %v1863
    %v1865 = vmul.f32 1.0, %v1864
    %1866 = vst [vmem:[#allocation8] sm:$0x3] %v1865
    // Predicated region
    $region22: #{tpu_custom_call.1} parent=1 // pred_check
      _
    $region23: #{tpu_custom_call.1} parent=1 // pred_check_branch
      %1868 = sbr.rel (0) target = $region25
    $region24: #{tpu_custom_call.1} parent=1 // pred_region
      %s1870 = ssub.s32 32, 32
      %1871 = vsyncadd [#allocation5], %s1870
      %s1873 = sshll.u32 [#allocation8], 4
      %s1874 = int_to_ptr.vmem [resolvable:$true] %s1873
      %1876 = dma.vmem_to_hbm [thread:$0]  %s1874, 32, %s3, [#allocation5]
    $region25: #{tpu_custom_call.1} parent=1 // pred_fallthru
      _
    // Predicated region
    $region26: #{tpu_custom_call.1} parent=1 // pred_check
      _
    $region27: #{tpu_custom_call.1} parent=1 // pred_check_branch
      %1878 = sbr.rel (0) target = $region29
    $region28: #{tpu_custom_call.1} parent=1 // pred_region
      %1879 = dma.done [#allocation5], 32
    $region29: #{tpu_custom_call.1} parent=1 // pred_fallthru
      _
    %1880 = vsyncpa [#allocation4], 1
    %1881 = vsyncpa [#allocation7], 1
    %1882 = vsyncpa [#allocation5], 1

</llo_original>
